<compile_context>
chip_gen: v7x
topology: tpu7x:2x2x1
jax: 0.10.0
libtpu: 0.0.40
codegen_flags: <defaults>
</compile_context>

<pallas_src>
import numpy as np
import jax
import jax.numpy as jnp
from jax.experimental import pallas as pl
from jax.experimental.pallas import tpu as pltpu


FP = 128            # lane width used for every feature dimension (all <= 128 here)
NEG = -1.0e30       # additive mask for padded attention rows


def _rup(n, m):
    return ((n + m - 1) // m) * m


def _rup8(n):
    return max(_rup(int(n), 8), 8)


def pad_input(a, rows):
    """Pad a dynamic input to (rows, 128). Call OUTSIDE the jitted hot path."""
    a = jnp.asarray(a, jnp.float32)
    return jnp.pad(a, ((0, rows - a.shape[0]), (0, FP - a.shape[1])))


# ---------------------------------------------------------------------------
# One-time host-side preparation: packed operator / weight slabs + layout cfg
# ---------------------------------------------------------------------------
def prepare_gatv3(params, edge_index, batch, num_nodes, num_graphs, heads, node_out):
    row = np.asarray(edge_index[0]).astype(np.int64)
    col = np.asarray(edge_index[1]).astype(np.int64)
    batch = np.asarray(batch).astype(np.int64)
    N, E, B, H, C = int(num_nodes), int(row.shape[0]), int(num_graphs), int(heads), int(node_out)
    HC = H * C

    node_in = int(params["w_l"].shape[0])
    edge_in = int(params["w_edge"].shape[0]) - node_in
    edge_out = int(params["w_edge"].shape[1])
    global_in = int(params["w_g"].shape[0]) - node_out
    global_out = int(params["w_g"].shape[1])

    for d in (node_in, edge_in, global_in, edge_out, HC, node_out, global_out):
        assert d <= FP, "feature dims > 128 need a tiled redesign"
    assert H <= 8

    # GATv2Conv graph: remove existing self loops, add self loops (fill='mean')
    keep = row != col
    kept_idx = np.nonzero(keep)[0]
    r2, c2 = row[keep], col[keep]
    E2 = int(r2.shape[0])
    Eg = E2 + N

    N_p, E_p, B_p = _rup8(N), _rup8(E), _rup8(B)
    Eg_p, H_p = _rup8(Eg), 8

    # -------- ops slab: one-hot / 1/deg operators + attention vector + mask --
    ops_lane = max(N_p, E_p, Eg_p, B_p, H_p)
    oo, r = {}, 0
    for name, rows in (("src_e", E_p), ("src", Eg_p), ("dst", Eg_p), ("smf", Eg_p),
                       ("dst_t", N_p), ("boh", N_p), ("meanb", B_p),
                       ("mask", Eg_p), ("att", FP)):
        oo[name] = r
        r += rows
    ops = np.zeros((r, ops_lane), np.float32)

    # x[row] gather for the edge model (original edge list)
    ops[oo["src_e"] + np.arange(E), row] = 1.0
    # GAT edge list = kept edges followed by self loops
    ops[oo["src"] + np.arange(E2), r2] = 1.0
    ops[oo["dst"] + np.arange(E2), c2] = 1.0
    ops[oo["src"] + E2 + np.arange(N), np.arange(N)] = 1.0
    ops[oo["dst"] + E2 + np.arange(N), np.arange(N)] = 1.0
    # transpose of dst (scatter-add at targets)
    ops[oo["dst_t"] + c2, np.arange(E2)] = 1.0
    ops[oo["dst_t"] + np.arange(N), E2 + np.arange(N)] = 1.0
    # edge features for the GAT edge list: copy kept edges, mean-fill self loops
    ops[oo["smf"] + np.arange(E2), kept_idx] = 1.0
    deg = np.zeros((N,), np.float32)
    np.add.at(deg, c2, 1.0)
    for e, tgt in zip(kept_idx, c2):
        ops[oo["smf"] + E2 + tgt, e] = 1.0 / deg[tgt]
    # glob[batch] gather and scatter_mean(x, batch)
    ops[oo["boh"] + np.arange(N), batch] = 1.0
    cnt = np.maximum(np.bincount(batch, minlength=B).astype(np.float32), 1.0)
    ops[oo["meanb"] + batch, np.arange(N)] = 1.0 / cnt[batch]
    # -inf bias on padded attention rows -> softmax shift uses real rows only
    ops[oo["mask"] + Eg:oo["mask"] + Eg_p, :H_p] = NEG
    # att vector as a (HC, H) matrix: logits = leaky_relu(pre) @ att_mat
    att = np.asarray(params["att"], np.float32)
    for h in range(H):
        ops[oo["att"] + h * C + np.arange(C), h] = att[h]

    # -------- 128-lane weight slab (fused weights, expand matrix, biases) ----
    wo, r = {}, 0
    for name, rows in (("edge", 2 * FP), ("n2", 2 * FP), ("g", 2 * FP),
                       ("le", FP), ("expand", H_p), ("bias", 8)):
        wo[name] = r
        r += rows
    W = np.zeros((r, FP), np.float32)
    we = np.asarray(params["w_edge"], np.float32)
    W[wo["edge"]:wo["edge"] + node_in, :edge_out] = we[:node_in]
    W[wo["edge"] + FP:wo["edge"] + FP + edge_in, :edge_out] = we[node_in:]
    wn2 = np.asarray(params["w_n2"], np.float32)
    W[wo["n2"]:wo["n2"] + HC, :node_out] = wn2[:HC]
    W[wo["n2"] + FP:wo["n2"] + FP + global_in, :node_out] = wn2[HC:]
    wg = np.asarray(params["w_g"], np.float32)
    W[wo["g"]:wo["g"] + global_in, :global_out] = wg[:global_in]
    W[wo["g"] + FP:wo["g"] + FP + node_out, :global_out] = wg[global_in:]
    W[wo["le"]:wo["le"] + edge_out, :HC] = np.asarray(params["w_le"], np.float32)
    for h in range(H):
        W[wo["expand"] + h, h * C:(h + 1) * C] = 1.0
    W[wo["bias"] + 0, :edge_out] = np.asarray(params["b_edge"], np.float32)
    W[wo["bias"] + 1, :HC] = np.asarray(params["b_l"], np.float32)
    W[wo["bias"] + 2, :HC] = np.asarray(params["b_r"], np.float32)
    W[wo["bias"] + 3, :HC] = np.asarray(params["b_gat"], np.float32)
    W[wo["bias"] + 4, :node_out] = np.asarray(params["b_n2"], np.float32)
    W[wo["bias"] + 5, :global_out] = np.asarray(params["b_g"], np.float32)

    # fused [W_l | W_r] for the GATv2 node projections
    WLR = np.zeros((FP, 2 * FP), np.float32)
    WLR[:node_in, :HC] = np.asarray(params["w_l"], np.float32)
    WLR[:node_in, FP:FP + HC] = np.asarray(params["w_r"], np.float32)

    prepared = dict(ops=jnp.asarray(ops), w=jnp.asarray(W), wlr=jnp.asarray(WLR))
    cfg = dict(N=N, E=E, B=B, N_p=N_p, E_p=E_p, B_p=B_p, Eg_p=Eg_p, H_p=H_p,
               node_out=node_out, edge_out=edge_out, global_out=global_out,
               ops_off=oo, w_off=wo)
    return prepared, cfg


# ---------------------------------------------------------------------------
# Fused Pallas kernel: entire GATv3_block forward in one launch
# ---------------------------------------------------------------------------
def _make_kernel(cfg):
    N_p, E_p, B_p = cfg["N_p"], cfg["E_p"], cfg["B_p"]
    Eg_p, H_p = cfg["Eg_p"], cfg["H_p"]
    oo, wo = cfg["ops_off"], cfg["w_off"]

    def kernel(x_ref, ea_ref, g_ref, ops_ref, wlr_ref, w_ref, xo_ref, eo_ref, uo_ref):
        f32 = jnp.float32
        x = x_ref[...]                                     # (N_p, FP)
        ea = ea_ref[...]                                   # (E_p, FP)
        glob = g_ref[...]                                  # (B_p, FP)

        # --- graph operators: static, aligned slices of the packed ops slab ---
        src_e = ops_ref[oo["src_e"]:oo["src_e"] + E_p, 0:N_p]
        src = ops_ref[oo["src"]:oo["src"] + Eg_p, 0:N_p]
        dst = ops_ref[oo["dst"]:oo["dst"] + Eg_p, 0:N_p]
        smf = ops_ref[oo["smf"]:oo["smf"] + Eg_p, 0:E_p]
        dst_t = ops_ref[oo["dst_t"]:oo["dst_t"] + N_p, 0:Eg_p]
        b_oh = ops_ref[oo["boh"]:oo["boh"] + N_p, 0:B_p]
        mean_b = ops_ref[oo["meanb"]:oo["meanb"] + B_p, 0:N_p]
        row_mask = ops_ref[oo["mask"]:oo["mask"] + Eg_p, 0:H_p]
        att_mat = ops_ref[oo["att"]:oo["att"] + FP, 0:H_p]

        # ---- 1) edge model: relu([x[row] | edge_attr] @ W_edge + b_edge) ----
        x_src = jnp.dot(src_e, x, preferred_element_type=f32)          # (E_p, FP)
        e_cat = jnp.concatenate([x_src, ea], axis=1)                   # (E_p, 2FP)
        w_edge = w_ref[wo["edge"]:wo["edge"] + 2 * FP, :]
        b_e = w_ref[wo["bias"] + 0:wo["bias"] + 1, :]
        e_new = jnp.maximum(
            jnp.dot(e_cat, w_edge, preferred_element_type=f32) + b_e, 0.0)
        eo_ref[...] = e_new

        # ---- 2) GATv2Conv(x, edge_index (+self loops, mean fill), e_new) ----
        xlr = jnp.dot(x, wlr_ref[...], preferred_element_type=f32)     # (N_p, 2FP)
        xl = xlr[:, :FP] + w_ref[wo["bias"] + 1:wo["bias"] + 2, :]
        xr = xlr[:, FP:] + w_ref[wo["bias"] + 2:wo["bias"] + 3, :]
        xl_src = jnp.dot(src, xl, preferred_element_type=f32)          # (Eg_p, FP)
        xr_dst = jnp.dot(dst, xr, preferred_element_type=f32)          # (Eg_p, FP)
        w_le = w_ref[wo["le"]:wo["le"] + FP, :]
        e_proj = jnp.dot(e_new, w_le, preferred_element_type=f32)      # (E_p, FP)
        e_term = jnp.dot(smf, e_proj, preferred_element_type=f32)      # (Eg_p, FP)
        pre = xl_src + xr_dst + e_term
        act = jnp.where(pre > 0.0, pre, 0.2 * pre)                     # leaky_relu(0.2)
        logits = jnp.dot(act, att_mat, preferred_element_type=f32) + row_mask
        shift = jnp.max(logits, axis=0, keepdims=True)                 # real rows only
        ex = jnp.exp(logits - shift)                                   # (Eg_p, H_p)
        den = jnp.dot(dst_t, ex, preferred_element_type=f32)           # (N_p, H_p)
        den_e = jnp.dot(dst, den, preferred_element_type=f32)          # (Eg_p, H_p)
        alpha = ex * pl.reciprocal(jnp.maximum(den_e, 1e-20), approx=False)
        expand = w_ref[wo["expand"]:wo["expand"] + H_p, :]
        alpha_full = jnp.dot(alpha, expand, preferred_element_type=f32)  # (Eg_p, FP)
        msgs = alpha_full * xl_src
        gat = (jnp.dot(dst_t, msgs, preferred_element_type=f32)
               + w_ref[wo["bias"] + 3:wo["bias"] + 4, :])              # (N_p, FP)

        # ---- 3) node_mlp_2: relu([gat | glob[batch]] @ W_n2 + b_n2) ---------
        g_gather = jnp.dot(b_oh, glob, preferred_element_type=f32)     # (N_p, FP)
        n_cat = jnp.concatenate([gat, g_gather], axis=1)               # (N_p, 2FP)
        w_n2 = w_ref[wo["n2"]:wo["n2"] + 2 * FP, :]
        b_n2 = w_ref[wo["bias"] + 4:wo["bias"] + 5, :]
        x_new = jnp.maximum(
            jnp.dot(n_cat, w_n2, preferred_element_type=f32) + b_n2, 0.0)
        xo_ref[...] = x_new

        # ---- 4) global model: relu([glob | scatter_mean(x_new)] @ W_g + b_g) -
        x_mean = jnp.dot(mean_b, x_new, preferred_element_type=f32)    # (B_p, FP)
        u_cat = jnp.concatenate([glob, x_mean], axis=1)                # (B_p, 2FP)
        w_g = w_ref[wo["g"]:wo["g"] + 2 * FP, :]
        b_g = w_ref[wo["bias"] + 5:wo["bias"] + 6, :]
        uo_ref[...] = jnp.maximum(
            jnp.dot(u_cat, w_g, preferred_element_type=f32) + b_g, 0.0)

    return kernel


# ---------------------------------------------------------------------------
# Forward pass: single fused, grid-less pallas_call (expects padded inputs)
# ---------------------------------------------------------------------------
def gatv3_forward(prepared, cfg, x_pad, ea_pad, g_pad):
    N_p, E_p, B_p, Eg_p, H_p = cfg["N_p"], cfg["E_p"], cfg["B_p"], cfg["Eg_p"], cfg["H_p"]
    out_shape = (
        jax.ShapeDtypeStruct((N_p, FP), jnp.float32),
        jax.ShapeDtypeStruct((E_p, FP), jnp.float32),
        jax.ShapeDtypeStruct((B_p, FP), jnp.float32),
    )
    inputs = (x_pad, ea_pad, g_pad, prepared["ops"], prepared["wlr"], prepared["w"])
    bytes_accessed = (sum(int(np.prod(a.shape)) * 4 for a in inputs)
                      + (N_p + E_p + B_p) * FP * 4)
    flops = 2 * (
        E_p * N_p * FP + E_p * 2 * FP * FP + N_p * FP * 2 * FP
        + 2 * Eg_p * N_p * FP + E_p * FP * FP + Eg_p * E_p * FP
        + Eg_p * FP * H_p + N_p * Eg_p * H_p + Eg_p * N_p * H_p
        + Eg_p * H_p * FP + N_p * Eg_p * FP + N_p * B_p * FP
        + N_p * 2 * FP * FP + B_p * N_p * FP + B_p * 2 * FP * FP)
    return pl.pallas_call(
        _make_kernel(cfg),
        out_shape=out_shape,
        compiler_params=pltpu.CompilerParams(vmem_limit_bytes=8 * 1024 * 1024),
        cost_estimate=pl.CostEstimate(flops=flops, transcendentals=Eg_p * H_p,
                                      bytes_accessed=bytes_accessed),
    )(*inputs)


# ---------------------------------------------------------------------------
# Pure-JAX reference of the same forward pass (PyG MetaLayer + GATv2Conv)
# ---------------------------------------------------------------------------
def reference_forward(params, x, edge_attr, glob, batch, edge_index, heads, node_out):
    row = np.asarray(edge_index[0]).astype(np.int64)
    col = np.asarray(edge_index[1]).astype(np.int64)
    batch = np.asarray(batch).astype(np.int64)
    N, B = x.shape[0], glob.shape[0]
    H, C = heads, node_out
    HC = H * C

    e_cat = jnp.concatenate([x[row], edge_attr], axis=1)
    e_new = jax.nn.relu(e_cat @ params["w_edge"] + params["b_edge"])

    keep = row != col
    kept_idx = np.nonzero(keep)[0]
    r2, c2 = row[keep], col[keep]
    ea2 = e_new[kept_idx]
    deg = np.zeros((N,), np.float32)
    np.add.at(deg, c2, 1.0)
    loop_sum = jnp.zeros((N, e_new.shape[1]), jnp.float32).at[c2].add(ea2)
    loop_attr = loop_sum / jnp.maximum(jnp.asarray(deg, jnp.float32), 1.0)[:, None]
    rf = np.concatenate([r2, np.arange(N)])
    cf = np.concatenate([c2, np.arange(N)])
    ef = jnp.concatenate([ea2, loop_attr], axis=0)

    xl = (x @ params["w_l"] + params["b_l"]).reshape(N, H, C)
    xr = (x @ params["w_r"] + params["b_r"]).reshape(N, H, C)
    et = (ef @ params["w_le"]).reshape(-1, H, C)
    pre = xl[rf] + xr[cf] + et
    act = jnp.where(pre > 0, pre, 0.2 * pre)
    logits = (act * params["att"][None, :, :]).sum(-1)
    gmax = jnp.full((N, H), -jnp.inf, jnp.float32).at[cf].max(logits)
    ex = jnp.exp(logits - gmax[cf])
    den = jnp.zeros((N, H), jnp.float32).at[cf].add(ex)
    alpha = ex / den[cf]
    msgs = alpha[:, :, None] * xl[rf]
    gat = jnp.zeros((N, H, C), jnp.float32).at[cf].add(msgs).reshape(N, HC)
    gat = gat + params["b_gat"]

    x_new = jax.nn.relu(
        jnp.concatenate([gat, glob[batch]], axis=1) @ params["w_n2"] + params["b_n2"])

    cnt = jnp.maximum(jnp.zeros((B,), jnp.float32).at[batch].add(1.0), 1.0)
    xmean = jnp.zeros((B, x_new.shape[1]), jnp.float32).at[batch].add(x_new) / cnt[:, None]
    u_new = jax.nn.relu(
        jnp.concatenate([glob, xmean], axis=1) @ params["w_g"] + params["b_g"])
    return x_new, e_new, u_new


# ---------------------------------------------------------------------------
# Main
# ---------------------------------------------------------------------------
if __name__ == "__main__":
    node_in, edge_in, global_in = 12, 6, 8
    hid = 32        # accepted by GATv3_block.__init__ but unused in its forward
    node_out, edge_out, global_out = 16, 10, 8
    heads = 3

    N, E, B = 6, 8, 2
    batch = np.array([0, 0, 0, 1, 1, 1], np.int32)

    rng = np.random.RandomState(0)
    row = rng.randint(0, N, size=E)
    col = (row + 1 + rng.randint(0, N - 1, size=E)) % N
    col[0] = row[0]                 # one self loop (removed/re-added by GATv2Conv)
    edge_index = np.stack([row, col]).astype(np.int32)

    key = jax.random.PRNGKey(0)
    ks = jax.random.split(key, 16)

    def w(k, i, o, s=0.2):
        return jax.random.normal(k, (i, o), jnp.float32) * s

    params = {
        "w_edge": w(ks[0], node_in + edge_in, edge_out),
        "b_edge": jax.random.normal(ks[1], (edge_out,), jnp.float32) * 0.05,
        "w_l": w(ks[2], node_in, heads * node_out),
        "b_l": jax.random.normal(ks[3], (heads * node_out,), jnp.float32) * 0.05,
        "w_r": w(ks[4], node_in, heads * node_out),
        "b_r": jax.random.normal(ks[5], (heads * node_out,), jnp.float32) * 0.05,
        "w_le": w(ks[6], edge_out, heads * node_out),
        "att": jax.random.normal(ks[7], (heads, node_out), jnp.float32) * 0.2,
        "b_gat": jax.random.normal(ks[8], (heads * node_out,), jnp.float32) * 0.05,
        "w_n2": w(ks[9], heads * node_out + global_in, node_out),
        "b_n2": jax.random.normal(ks[10], (node_out,), jnp.float32) * 0.05,
        "w_g": w(ks[11], global_in + node_out, global_out),
        "b_g": jax.random.normal(ks[12], (global_out,), jnp.float32) * 0.05,
    }

    x = jax.random.normal(ks[13], (N, node_in), jnp.float32)
    edge_attr = jax.random.normal(ks[14], (E, edge_in), jnp.float32)
    glob = jax.random.normal(ks[15], (B, global_in), jnp.float32)

    # one-time preparation: packed operator / weight slabs (3 static arrays)
    prepared, cfg = prepare_gatv3(params, edge_index, batch, N, B, heads, node_out)

    # pad the dynamic inputs ONCE, outside the jitted hot path
    x_pad = pad_input(x, cfg["N_p"])
    ea_pad = pad_input(edge_attr, cfg["E_p"])
    g_pad = pad_input(glob, cfg["B_p"])

    fwd = jax.jit(lambda prep, xx, ee, gg: gatv3_forward(prep, cfg, xx, ee, gg))
    xo, eo, uo = jax.block_until_ready(fwd(prepared, x_pad, ea_pad, g_pad))

    x_new = np.asarray(xo)[:N, :node_out]
    e_new = np.asarray(eo)[:E, :edge_out]
    u_new = np.asarray(uo)[:B, :global_out]

    # validate against the pure-JAX reference of the same forward pass
    x_ref, e_ref, u_ref = jax.block_until_ready(reference_forward(
        params, x, edge_attr, glob, batch, edge_index, heads, node_out))

    assert x_new.shape == (N, node_out)
    assert e_new.shape == (E, edge_out)
    assert u_new.shape == (B, global_out)
    np.testing.assert_allclose(x_new, np.asarray(x_ref), rtol=1e-4, atol=1e-4)
    np.testing.assert_allclose(e_new, np.asarray(e_ref), rtol=1e-4, atol=1e-4)
    np.testing.assert_allclose(u_new, np.asarray(u_ref), rtol=1e-4, atol=1e-4)

    print("KERNEL_OK")
</pallas_src>

<mosaic_0001>
module attributes {stable_mosaic.version = 11 : i64} {
  func.func @kernel(%arg0: memref<8x128xf32, #tpu.memory_space<vmem>>, %arg1: memref<8x128xf32, #tpu.memory_space<vmem>>, %arg2: memref<8x128xf32, #tpu.memory_space<vmem>>, %arg3: memref<224x16xf32, #tpu.memory_space<vmem>>, %arg4: memref<128x256xf32, #tpu.memory_space<vmem>>, %arg5: memref<912x128xf32, #tpu.memory_space<vmem>>, %arg6: memref<8x128xf32, #tpu.memory_space<vmem>>, %arg7: memref<8x128xf32, #tpu.memory_space<vmem>>, %arg8: memref<8x128xf32, #tpu.memory_space<vmem>>) attributes {dimension_semantics = [], scalar_prefetch = 0 : i64, scratch_operands = 0 : i64, tpu.core_type = #tpu.core_type<tc>} {
    %c0 = arith.constant 0 : index
    %c0_0 = arith.constant 0 : index
    %0 = vector.load %arg0[%c0, %c0_0] : memref<8x128xf32, #tpu.memory_space<vmem>>, vector<8x128xf32>
    %c0_1 = arith.constant 0 : index
    %c0_2 = arith.constant 0 : index
    %1 = vector.load %arg1[%c0_1, %c0_2] : memref<8x128xf32, #tpu.memory_space<vmem>>, vector<8x128xf32>
    %c0_3 = arith.constant 0 : index
    %c0_4 = arith.constant 0 : index
    %2 = vector.load %arg2[%c0_3, %c0_4] : memref<8x128xf32, #tpu.memory_space<vmem>>, vector<8x128xf32>
    %c0_5 = arith.constant 0 : index
    %c0_6 = arith.constant 0 : index
    %3 = vector.load %arg3[%c0_5, %c0_6] : memref<224x16xf32, #tpu.memory_space<vmem>>, vector<8x8xf32>
    %c8 = arith.constant 8 : index
    %c0_7 = arith.constant 0 : index
    %4 = vector.load %arg3[%c8, %c0_7] : memref<224x16xf32, #tpu.memory_space<vmem>>, vector<16x8xf32>
    %c24 = arith.constant 24 : index
    %c0_8 = arith.constant 0 : index
    %5 = vector.load %arg3[%c24, %c0_8] : memref<224x16xf32, #tpu.memory_space<vmem>>, vector<16x8xf32>
    %c40 = arith.constant 40 : index
    %c0_9 = arith.constant 0 : index
    %6 = vector.load %arg3[%c40, %c0_9] : memref<224x16xf32, #tpu.memory_space<vmem>>, vector<16x8xf32>
    %c56 = arith.constant 56 : index
    %c0_10 = arith.constant 0 : index
    %7 = vector.load %arg3[%c56, %c0_10] : memref<224x16xf32, #tpu.memory_space<vmem>>, vector<8x16xf32>
    %c64 = arith.constant 64 : index
    %c0_11 = arith.constant 0 : index
    %8 = vector.load %arg3[%c64, %c0_11] : memref<224x16xf32, #tpu.memory_space<vmem>>, vector<8x8xf32>
    %c72 = arith.constant 72 : index
    %c0_12 = arith.constant 0 : index
    %9 = vector.load %arg3[%c72, %c0_12] : memref<224x16xf32, #tpu.memory_space<vmem>>, vector<8x8xf32>
    %c80 = arith.constant 80 : index
    %c0_13 = arith.constant 0 : index
    %10 = vector.load %arg3[%c80, %c0_13] : memref<224x16xf32, #tpu.memory_space<vmem>>, vector<16x8xf32>
    %c96 = arith.constant 96 : index
    %c0_14 = arith.constant 0 : index
    %11 = vector.load %arg3[%c96, %c0_14] : memref<224x16xf32, #tpu.memory_space<vmem>>, vector<128x8xf32>
    %cst = arith.constant dense<0.000000e+00> : vector<8x128xf32>
    %12 = tpu.matmul %3, %0, %cst {dimension_numbers = #tpu.dot_dimension_numbers<[1], [0], [0], [1], [0, 0, 1, 1], [], []>} : vector<8x8xf32>, vector<8x128xf32>, vector<8x128xf32> -> vector<8x128xf32>
    %13 = tpu.concatenate %12, %1 in 1 : vector<8x128xf32>, vector<8x128xf32> -> vector<8x256xf32>
    %c0_15 = arith.constant 0 : index
    %c0_16 = arith.constant 0 : index
    %14 = vector.load %arg5[%c0_15, %c0_16] : memref<912x128xf32, #tpu.memory_space<vmem>>, vector<256x128xf32>
    %c904 = arith.constant 904 : index
    %c0_17 = arith.constant 0 : index
    %15 = vector.load %arg5[%c904, %c0_17] : memref<912x128xf32, #tpu.memory_space<vmem>>, vector<1x128xf32>
    %cst_18 = arith.constant dense<0.000000e+00> : vector<8x128xf32>
    %16 = tpu.matmul %13, %14, %cst_18 {dimension_numbers = #tpu.dot_dimension_numbers<[1], [0], [0], [1], [0, 0, 1, 1], [], []>} : vector<8x256xf32>, vector<256x128xf32>, vector<8x128xf32> -> vector<8x128xf32>
    %17 = vector.broadcast %15 : vector<1x128xf32> to vector<8x128xf32>
    %18 = arith.addf %16, %17 : vector<8x128xf32>
    %cst_19 = arith.constant 0.000000e+00 : f32
    %19 = vector.broadcast %cst_19 : f32 to vector<8x128xf32>
    %20 = arith.maximumf %18, %19 : vector<8x128xf32>
    %c0_20 = arith.constant 0 : index
    %c0_21 = arith.constant 0 : index
    %21 = vector.load %arg7[%c0_20, %c0_21] : memref<8x128xf32, #tpu.memory_space<vmem>>, vector<8x128xf32>
    tpu.vector_store %arg7[%c0_20, %c0_21], %20 {strides = array<i32>} : memref<8x128xf32, #tpu.memory_space<vmem>>, vector<8x128xf32>,
    %c0_22 = arith.constant 0 : index
    %c0_23 = arith.constant 0 : index
    %22 = vector.load %arg4[%c0_22, %c0_23] : memref<128x256xf32, #tpu.memory_space<vmem>>, vector<128x256xf32>
    %cst_24 = arith.constant dense<0.000000e+00> : vector<8x256xf32>
    %23 = tpu.matmul %0, %22, %cst_24 {dimension_numbers = #tpu.dot_dimension_numbers<[1], [0], [0], [1], [0, 0, 1, 1], [], []>} : vector<8x128xf32>, vector<128x256xf32>, vector<8x256xf32> -> vector<8x256xf32>
    %24 = vector.extract_strided_slice %23 {offsets = [0, 0], sizes = [8, 128], strides = [1, 1]} : vector<8x256xf32> to vector<8x128xf32>
    %c905 = arith.constant 905 : index
    %c0_25 = arith.constant 0 : index
    %25 = vector.load %arg5[%c905, %c0_25] : memref<912x128xf32, #tpu.memory_space<vmem>>, vector<1x128xf32>
    %26 = vector.broadcast %25 : vector<1x128xf32> to vector<8x128xf32>
    %27 = arith.addf %24, %26 : vector<8x128xf32>
    %28 = vector.extract_strided_slice %23 {offsets = [0, 128], sizes = [8, 128], strides = [1, 1]} : vector<8x256xf32> to vector<8x128xf32>
    %c906 = arith.constant 906 : index
    %c0_26 = arith.constant 0 : index
    %29 = vector.load %arg5[%c906, %c0_26] : memref<912x128xf32, #tpu.memory_space<vmem>>, vector<1x128xf32>
    %30 = vector.broadcast %29 : vector<1x128xf32> to vector<8x128xf32>
    %31 = arith.addf %28, %30 : vector<8x128xf32>
    %cst_27 = arith.constant dense<0.000000e+00> : vector<16x128xf32>
    %32 = tpu.matmul %4, %27, %cst_27 {dimension_numbers = #tpu.dot_dimension_numbers<[1], [0], [0], [1], [0, 0, 1, 1], [], []>} : vector<16x8xf32>, vector<8x128xf32>, vector<16x128xf32> -> vector<16x128xf32>
    %cst_28 = arith.constant dense<0.000000e+00> : vector<16x128xf32>
    %33 = tpu.matmul %5, %31, %cst_28 {dimension_numbers = #tpu.dot_dimension_numbers<[1], [0], [0], [1], [0, 0, 1, 1], [], []>} : vector<16x8xf32>, vector<8x128xf32>, vector<16x128xf32> -> vector<16x128xf32>
    %c768 = arith.constant 768 : index
    %c0_29 = arith.constant 0 : index
    %34 = vector.load %arg5[%c768, %c0_29] : memref<912x128xf32, #tpu.memory_space<vmem>>, vector<128x128xf32>
    %cst_30 = arith.constant dense<0.000000e+00> : vector<8x128xf32>
    %35 = tpu.matmul %20, %34, %cst_30 {dimension_numbers = #tpu.dot_dimension_numbers<[1], [0], [0], [1], [0, 0, 1, 1], [], []>} : vector<8x128xf32>, vector<128x128xf32>, vector<8x128xf32> -> vector<8x128xf32>
    %cst_31 = arith.constant dense<0.000000e+00> : vector<16x128xf32>
    %36 = tpu.matmul %6, %35, %cst_31 {dimension_numbers = #tpu.dot_dimension_numbers<[1], [0], [0], [1], [0, 0, 1, 1], [], []>} : vector<16x8xf32>, vector<8x128xf32>, vector<16x128xf32> -> vector<16x128xf32>
    %37 = arith.addf %32, %33 : vector<16x128xf32>
    %38 = arith.addf %37, %36 : vector<16x128xf32>
    %cst_32 = arith.constant 0.000000e+00 : f32
    %39 = vector.broadcast %cst_32 : f32 to vector<16x128xf32>
    %40 = arith.cmpf ogt, %38, %39 : vector<16x128xf32>
    %cst_33 = arith.constant 2.000000e-01 : f32
    %41 = vector.broadcast %cst_33 : f32 to vector<16x128xf32>
    %42 = arith.mulf %41, %38 : vector<16x128xf32>
    %43 = arith.select %40, %38, %42 : vector<16x128xi1>, vector<16x128xf32>
    %cst_34 = arith.constant dense<0.000000e+00> : vector<16x8xf32>
    %44 = tpu.matmul %43, %11, %cst_34 {dimension_numbers = #tpu.dot_dimension_numbers<[1], [0], [0], [1], [0, 0, 1, 1], [], []>} : vector<16x128xf32>, vector<128x8xf32>, vector<16x8xf32> -> vector<16x8xf32>
    %45 = arith.addf %44, %10 : vector<16x8xf32>
    %cst_35 = arith.constant dense<0xFF800000> : vector<8xf32>
    %46 = vector.multi_reduction <maximumf>, %45, %cst_35 [0] : vector<16x8xf32> to vector<8xf32>
    %47 = vector.shape_cast %46 : vector<8xf32> to vector<1x8xf32>
    %48 = vector.broadcast %47 : vector<1x8xf32> to vector<16x8xf32>
    %49 = arith.subf %45, %48 : vector<16x8xf32>
    %50 = math.exp %49 : vector<16x8xf32>
    %cst_36 = arith.constant dense<0.000000e+00> : vector<8x8xf32>
    %51 = tpu.matmul %7, %50, %cst_36 {dimension_numbers = #tpu.dot_dimension_numbers<[1], [0], [0], [1], [0, 0, 1, 1], [], []>} : vector<8x16xf32>, vector<16x8xf32>, vector<8x8xf32> -> vector<8x8xf32>
    %cst_37 = arith.constant dense<0.000000e+00> : vector<16x8xf32>
    %52 = tpu.matmul %5, %51, %cst_37 {dimension_numbers = #tpu.dot_dimension_numbers<[1], [0], [0], [1], [0, 0, 1, 1], [], []>} : vector<16x8xf32>, vector<8x8xf32>, vector<16x8xf32> -> vector<16x8xf32>
    %cst_38 = arith.constant 9.99999968E-21 : f32
    %53 = vector.broadcast %cst_38 : f32 to vector<16x8xf32>
    %54 = arith.maximumf %52, %53 : vector<16x8xf32>
    %55 = tpu.reciprocal %54 : vector<16x8xf32> -> vector<16x8xf32>
    %56 = arith.mulf %50, %55 : vector<16x8xf32>
    %c896 = arith.constant 896 : index
    %c0_39 = arith.constant 0 : index
    %57 = vector.load %arg5[%c896, %c0_39] : memref<912x128xf32, #tpu.memory_space<vmem>>, vector<8x128xf32>
    %cst_40 = arith.constant dense<0.000000e+00> : vector<16x128xf32>
    %58 = tpu.matmul %56, %57, %cst_40 {dimension_numbers = #tpu.dot_dimension_numbers<[1], [0], [0], [1], [0, 0, 1, 1], [], []>} : vector<16x8xf32>, vector<8x128xf32>, vector<16x128xf32> -> vector<16x128xf32>
    %59 = arith.mulf %58, %32 : vector<16x128xf32>
    %cst_41 = arith.constant dense<0.000000e+00> : vector<8x128xf32>
    %60 = tpu.matmul %7, %59, %cst_41 {dimension_numbers = #tpu.dot_dimension_numbers<[1], [0], [0], [1], [0, 0, 1, 1], [], []>} : vector<8x16xf32>, vector<16x128xf32>, vector<8x128xf32> -> vector<8x128xf32>
    %c907 = arith.constant 907 : index
    %c0_42 = arith.constant 0 : index
    %61 = vector.load %arg5[%c907, %c0_42] : memref<912x128xf32, #tpu.memory_space<vmem>>, vector<1x128xf32>
    %62 = vector.broadcast %61 : vector<1x128xf32> to vector<8x128xf32>
    %63 = arith.addf %60, %62 : vector<8x128xf32>
    %cst_43 = arith.constant dense<0.000000e+00> : vector<8x128xf32>
    %64 = tpu.matmul %8, %2, %cst_43 {dimension_numbers = #tpu.dot_dimension_numbers<[1], [0], [0], [1], [0, 0, 1, 1], [], []>} : vector<8x8xf32>, vector<8x128xf32>, vector<8x128xf32> -> vector<8x128xf32>
    %65 = tpu.concatenate %63, %64 in 1 : vector<8x128xf32>, vector<8x128xf32> -> vector<8x256xf32>
    %c256 = arith.constant 256 : index
    %c0_44 = arith.constant 0 : index
    %66 = vector.load %arg5[%c256, %c0_44] : memref<912x128xf32, #tpu.memory_space<vmem>>, vector<256x128xf32>
    %c908 = arith.constant 908 : index
    %c0_45 = arith.constant 0 : index
    %67 = vector.load %arg5[%c908, %c0_45] : memref<912x128xf32, #tpu.memory_space<vmem>>, vector<1x128xf32>
    %cst_46 = arith.constant dense<0.000000e+00> : vector<8x128xf32>
    %68 = tpu.matmul %65, %66, %cst_46 {dimension_numbers = #tpu.dot_dimension_numbers<[1], [0], [0], [1], [0, 0, 1, 1], [], []>} : vector<8x256xf32>, vector<256x128xf32>, vector<8x128xf32> -> vector<8x128xf32>
    %69 = vector.broadcast %67 : vector<1x128xf32> to vector<8x128xf32>
    %70 = arith.addf %68, %69 : vector<8x128xf32>
    %cst_47 = arith.constant 0.000000e+00 : f32
    %71 = vector.broadcast %cst_47 : f32 to vector<8x128xf32>
    %72 = arith.maximumf %70, %71 : vector<8x128xf32>
    %c0_48 = arith.constant 0 : index
    %c0_49 = arith.constant 0 : index
    %73 = vector.load %arg6[%c0_48, %c0_49] : memref<8x128xf32, #tpu.memory_space<vmem>>, vector<8x128xf32>
    tpu.vector_store %arg6[%c0_48, %c0_49], %72 {strides = array<i32>} : memref<8x128xf32, #tpu.memory_space<vmem>>, vector<8x128xf32>,
    %cst_50 = arith.constant dense<0.000000e+00> : vector<8x128xf32>
    %74 = tpu.matmul %9, %72, %cst_50 {dimension_numbers = #tpu.dot_dimension_numbers<[1], [0], [0], [1], [0, 0, 1, 1], [], []>} : vector<8x8xf32>, vector<8x128xf32>, vector<8x128xf32> -> vector<8x128xf32>
    %75 = tpu.concatenate %2, %74 in 1 : vector<8x128xf32>, vector<8x128xf32> -> vector<8x256xf32>
    %c512 = arith.constant 512 : index
    %c0_51 = arith.constant 0 : index
    %76 = vector.load %arg5[%c512, %c0_51] : memref<912x128xf32, #tpu.memory_space<vmem>>, vector<256x128xf32>
    %c909 = arith.constant 909 : index
    %c0_52 = arith.constant 0 : index
    %77 = vector.load %arg5[%c909, %c0_52] : memref<912x128xf32, #tpu.memory_space<vmem>>, vector<1x128xf32>
    %cst_53 = arith.constant dense<0.000000e+00> : vector<8x128xf32>
    %78 = tpu.matmul %75, %76, %cst_53 {dimension_numbers = #tpu.dot_dimension_numbers<[1], [0], [0], [1], [0, 0, 1, 1], [], []>} : vector<8x256xf32>, vector<256x128xf32>, vector<8x128xf32> -> vector<8x128xf32>
    %79 = vector.broadcast %77 : vector<1x128xf32> to vector<8x128xf32>
    %80 = arith.addf %78, %79 : vector<8x128xf32>
    %cst_54 = arith.constant 0.000000e+00 : f32
    %81 = vector.broadcast %cst_54 : f32 to vector<8x128xf32>
    %82 = arith.maximumf %80, %81 : vector<8x128xf32>
    %c0_55 = arith.constant 0 : index
    %c0_56 = arith.constant 0 : index
    %83 = vector.load %arg8[%c0_55, %c0_56] : memref<8x128xf32, #tpu.memory_space<vmem>>, vector<8x128xf32>
    tpu.vector_store %arg8[%c0_55, %c0_56], %82 {strides = array<i32>} : memref<8x128xf32, #tpu.memory_space<vmem>>, vector<8x128xf32>,
    return
  }
}

</mosaic_0001>

<llo_original>
// kernel: _lambda_.1
$region0: #{_lambda_.1}
  #allocation0 [shape = 'u32[]', space=smem, size = 0x4, offset = 0x4, fixed_abs, tag = 'smem constant byte address 0x4 - core index']
  #allocation1 [shape = 'u32[144,128]{1,0:T(1,128)}', space=vmem, size = 0x12000, scoped, tag = 'internal scratch']
  %s0 = inlined_call_operand.vmem [shape: f32[8,128], index: 0, kind: input, shape index: {}]
  %s1 = inlined_call_operand.hbm [shape: f32[8,128], index: 1, kind: input, shape index: {}]
  %s2 = inlined_call_operand.vmem [shape: f32[8,128], index: 2, kind: input, shape index: {}]
  %s3 = inlined_call_operand.vmem [shape: f32[224,16], index: 3, kind: input, shape index: {}]
  %s4 = inlined_call_operand.vmem [shape: f32[128,256], index: 4, kind: input, shape index: {}]
  %s5 = inlined_call_operand.hbm [shape: f32[912,128], index: 5, kind: input, shape index: {}]
  %s6 = inlined_call_operand.hbm [shape: f32[8,128], index: 6, kind: output, shape index: {0}]
  %s7 = inlined_call_operand.hbm [shape: f32[8,128], index: 7, kind: output, shape index: {1}]
  %s8 = inlined_call_operand.hbm [shape: f32[8,128], index: 8, kind: output, shape index: {2}]
  %9 = xla_tuple %s6, %s7, %s8
  %s10 = sld [smem:[#allocation0]]
  $region58: #{_lambda_.1} parent=0
    _
  %s12 = ssub.s32 1, %s10
  %s13 = scalar_select 0, %s12, %s10
  $region1: #{_lambda_.1} parent=0
    #allocation2 [shape = 'u8[4096]{0}', space=vmem, size = 0x1000, scoped, tag = 'input window, operand 1, single buffered']
    #allocation3 [shape = 's32[1]{0}', space=sflag, size = 0x4, scoped, tag = 'scoped memory for _lambda_.1']
    #allocation4 [shape = 's32[1]{0}', space=sflag, size = 0x4, scoped, tag = 'scoped memory for _lambda_.1']
    #allocation5 [shape = 'u8[466944]{0}', space=vmem, size = 0x72000, scoped, tag = 'input window, operand 5, single buffered']
    #allocation6 [shape = 's32[1]{0}', space=sflag, size = 0x4, scoped, tag = 'scoped memory for _lambda_.1']
    #allocation7 [shape = 'u8[4096]{0}', space=vmem, size = 0x1000, scoped, tag = 'output window, operand 0, single buffered']
    #allocation8 [shape = 'u8[4096]{0}', space=vmem, size = 0x1000, scoped, tag = 'output window, operand 1, single buffered']
    #allocation9 [shape = 's32[1]{0}', space=sflag, size = 0x4, scoped, tag = 'scoped memory for _lambda_.1']
    #allocation10 [shape = 'u8[4096]{0}', space=vmem, size = 0x1000, scoped, tag = 'output window, operand 2, single buffered']
    %14 = vsyncpa [#allocation3], 0
    %15 = vsyncpa [#allocation6], 0
    %16 = vsyncpa [#allocation4], 0
    %17 = vsyncpa [#allocation9], 0
    // Predicated region
    $region2: #{_lambda_.1} parent=1 // pred_check
      _
    $region3: #{_lambda_.1} parent=1 // pred_check_branch
      %19 = sbr.rel (0) target = $region5
    $region4: #{_lambda_.1} parent=1 // pred_region
      _
    $region5: #{_lambda_.1} parent=1 // pred_fallthru
      _
    // Predicated region
    $region6: #{_lambda_.1} parent=1 // pred_check
      _
    $region7: #{_lambda_.1} parent=1 // pred_check_branch
      %21 = sbr.rel (0) target = $region9
    $region8: #{_lambda_.1} parent=1 // pred_region
      %s23 = ssub.s32 128, 128
      %24 = vsyncadd [#allocation3], %s23
      %s26 = sshll.u32 [#allocation2], 4
      %s27 = int_to_ptr.vmem [resolvable:$true] %s26
      %29 = dma.hbm_to_vmem [thread:$0]  %s1, 128, %s27, [#allocation3]
    $region9: #{_lambda_.1} parent=1 // pred_fallthru
      _
    // Predicated region
    $region10: #{_lambda_.1} parent=1 // pred_check
      _
    $region11: #{_lambda_.1} parent=1 // pred_check_branch
      %31 = sbr.rel (0) target = $region13
    $region12: #{_lambda_.1} parent=1 // pred_region
      _
    $region13: #{_lambda_.1} parent=1 // pred_fallthru
      _
    // Predicated region
    $region14: #{_lambda_.1} parent=1 // pred_check
      _
    $region15: #{_lambda_.1} parent=1 // pred_check_branch
      %33 = sbr.rel (0) target = $region17
    $region16: #{_lambda_.1} parent=1 // pred_region
      _
    $region17: #{_lambda_.1} parent=1 // pred_fallthru
      _
    // Predicated region
    $region18: #{_lambda_.1} parent=1 // pred_check
      _
    $region19: #{_lambda_.1} parent=1 // pred_check_branch
      %35 = sbr.rel (0) target = $region21
    $region20: #{_lambda_.1} parent=1 // pred_region
      _
    $region21: #{_lambda_.1} parent=1 // pred_fallthru
      _
    // Predicated region
    $region22: #{_lambda_.1} parent=1 // pred_check
      _
    $region23: #{_lambda_.1} parent=1 // pred_check_branch
      %37 = sbr.rel (0) target = $region25
    $region24: #{_lambda_.1} parent=1 // pred_region
      %s39 = ssub.s32 14592, 14592
      %40 = vsyncadd [#allocation6], %s39
      %s41 = sshll.u32 [#allocation5], 4
      %s42 = int_to_ptr.vmem [resolvable:$true] %s41
      %47 = dma.hbm_to_vmem [thread:$0]  %s5, 14592, %s42, [#allocation6], 128, 128, 8
    $region25: #{_lambda_.1} parent=1 // pred_fallthru
      _
    // Predicated region
    $region26: #{_lambda_.1} parent=1 // pred_check
      _
    $region27: #{_lambda_.1} parent=1 // pred_check_branch
      %49 = sbr.rel (0) target = $region29
    $region28: #{_lambda_.1} parent=1 // pred_region
      %50 = dma.done [#allocation3], 128
    $region29: #{_lambda_.1} parent=1 // pred_fallthru
      _
    // Predicated region
    $region30: #{_lambda_.1} parent=1 // pred_check
      _
    $region31: #{_lambda_.1} parent=1 // pred_check_branch
      %52 = sbr.rel (0) target = $region33
    $region32: #{_lambda_.1} parent=1 // pred_region
      %53 = dma.done [#allocation6], 14592
    $region33: #{_lambda_.1} parent=1 // pred_fallthru
      _
    %v54 = vld [vmem:[%s0] sm:$0xff]
    %v55 = vld [vmem:[#allocation2] sm:$0xff]
    %v56 = vld [vmem:[%s2] sm:$0xff]
    %v57 = vld [vmem:[%s3] sm:$0xff]
    %v58 = vld [vmem:[%s3 + $0x8] sm:$0xff]
    %v59 = vld [vmem:[%s3 + $0x10] sm:$0xff]
    %v60 = vld [vmem:[%s3 + $0x18] sm:$0xff]
    %v61 = vld [vmem:[%s3 + $0x20] sm:$0xff]
    %v62 = vld [vmem:[%s3 + $0x28] sm:$0xff]
    %v63 = vld [vmem:[%s3 + $0x30] sm:$0xff]
    %v64 = vld [vmem:[%s3 + $0x38] sm:$0xff]
    %v65 = vld [vmem:[%s3 + $0x40] sm:$0xff]
    %v66 = vld [vmem:[%s3 + $0x48] sm:$0xff]
    %v67 = vld [vmem:[%s3 + $0x50] sm:$0xff]
    %v68 = vld [vmem:[%s3 + $0x58] sm:$0xff]
    %v69 = vld [vmem:[%s3 + $0x60] sm:$0xff]
    %v70 = vld [vmem:[%s3 + $0x68] sm:$0xff]
    %v71 = vld [vmem:[%s3 + $0x70] sm:$0xff]
    %v72 = vld [vmem:[%s3 + $0x78] sm:$0xff]
    %v73 = vld [vmem:[%s3 + $0x80] sm:$0xff]
    %v74 = vld [vmem:[%s3 + $0x88] sm:$0xff]
    %v75 = vld [vmem:[%s3 + $0x90] sm:$0xff]
    %v76 = vld [vmem:[%s3 + $0x98] sm:$0xff]
    %v77 = vld [vmem:[%s3 + $0xa0] sm:$0xff]
    %v78 = vld [vmem:[%s3 + $0xa8] sm:$0xff]
    %v79 = vld [vmem:[%s3 + $0xb0] sm:$0xff]
    %v80 = vld [vmem:[%s3 + $0xb8] sm:$0xff]
    %v81 = vld [vmem:[%s3 + $0xc0] sm:$0xff]
    %v82 = vld [vmem:[%s3 + $0xc8] sm:$0xff]
    %v83 = vld [vmem:[%s3 + $0xd0] sm:$0xff]
    %v84 = vld [vmem:[%s3 + $0xd8] sm:$0xff]
    %vm85 = vcmask 64512
    %v87 = vsel %vm85, %v57, 0
    %89 = vmatprep.subr.mxu0 0.0
    %90 = vmatpush1.msra.mxu0 %v54
    %91 = vmatprep.subr.mxu0 0.0
    %92 = vmatpush1.msra.mxu0 0.0
    %93 = vmatprep.subr.mxu0 0.0
    %94 = vmatpush1.msra.mxu0 0.0
    %95 = vmatprep.subr.mxu0 0.0
    %96 = vmatpush1.msra.mxu0 0.0
    %97 = vmatprep.subr.mxu0 0.0
    %98 = vmatpush1.msra.mxu0 0.0
    %99 = vmatprep.subr.mxu0 0.0
    %100 = vmatpush1.msra.mxu0 0.0
    %101 = vmatprep.subr.mxu0 0.0
    %102 = vmatpush1.msra.mxu0 0.0
    %103 = vmatprep.subr.mxu0 0.0
    %104 = vmatpush1.msra.mxu0 0.0
    %105 = vmatprep.subr.mxu0 0.0
    %106 = vmatpush1.msra.mxu0 0.0
    %107 = vmatprep.subr.mxu0 0.0
    %108 = vmatpush1.msra.mxu0 0.0
    %109 = vmatprep.subr.mxu0 0.0
    %110 = vmatpush1.msra.mxu0 0.0
    %111 = vmatprep.subr.mxu0 0.0
    %112 = vmatpush1.msra.mxu0 0.0
    %113 = vmatprep.subr.mxu0 0.0
    %114 = vmatpush1.msra.mxu0 0.0
    %115 = vmatprep.subr.mxu0 0.0
    %116 = vmatpush1.msra.mxu0 0.0
    %117 = vmatprep.subr.mxu0 0.0
    %118 = vmatpush1.msra.mxu0 0.0
    %119 = vmatprep.subr.mxu0 0.0
    %120 = vmatpush1.msra.mxu0 0.0
    %121 = vmatprep.subr.mxu0 0.0
    %122 = vmatpush1.msra.mxu0 0.0
    %123 = vmatprep.subr.mxu0 0.0
    %124 = vmatpush1.msra.mxu0 0.0
    %125 = vmatprep.subr.mxu0 0.0
    %126 = vmatpush1.msra.mxu0 0.0
    %127 = vmatprep.subr.mxu0 0.0
    %128 = vmatpush1.msra.mxu0 0.0
    %129 = vmatprep.subr.mxu0 0.0
    %130 = vmatpush1.msra.mxu0 0.0
    %131 = vmatprep.subr.mxu0 0.0
    %132 = vmatpush1.msra.mxu0 0.0
    %133 = vmatprep.subr.mxu0 0.0
    %134 = vmatpush1.msra.mxu0 0.0
    %135 = vmatprep.subr.mxu0 0.0
    %136 = vmatpush1.msra.mxu0 0.0
    %137 = vmatprep.subr.mxu0 0.0
    %138 = vmatpush1.msra.mxu0 0.0
    %139 = vmatprep.subr.mxu0 0.0
    %140 = vmatpush1.msra.mxu0 0.0
    %141 = vmatprep.subr.mxu0 0.0
    %142 = vmatpush1.msra.mxu0 0.0
    %143 = vmatprep.subr.mxu0 0.0
    %144 = vmatpush1.msra.mxu0 0.0
    %145 = vmatprep.subr.mxu0 0.0
    %146 = vmatpush1.msra.mxu0 0.0
    %147 = vmatprep.subr.mxu0 0.0
    %148 = vmatpush1.msra.mxu0 0.0
    %149 = vmatprep.subr.mxu0 0.0
    %150 = vmatpush1.msra.mxu0 0.0
    %151 = vmatprep.subr.mxu0 0.0
    %152 = vmatpush1.msra.mxu0 0.0
    %153 = vmatprep.mubr.f32.mxu0 0.0
    %154 = vmatmul.mubr.f32.gmra.mrb[0].mxu0 %v87
    %v155 = vpop.f32.mrb[0].mxu0
    %v156 = vadd.f32 0.0, %v155
    %v157 = vpop.f32.mrb[0].mxu0
    %158 = vdwg.mxu0
    %v159 = vld [vmem:[#allocation5] sm:$0xff]
    %v160 = vld [vmem:[#allocation5 + $0x8] sm:$0xff]
    %v161 = vld [vmem:[#allocation5 + $0x10] sm:$0xff]
    %v162 = vld [vmem:[#allocation5 + $0x18] sm:$0xff]
    %v163 = vld [vmem:[#allocation5 + $0x20] sm:$0xff]
    %v164 = vld [vmem:[#allocation5 + $0x28] sm:$0xff]
    %v165 = vld [vmem:[#allocation5 + $0x30] sm:$0xff]
    %v166 = vld [vmem:[#allocation5 + $0x38] sm:$0xff]
    %v167 = vld [vmem:[#allocation5 + $0x40] sm:$0xff]
    %v168 = vld [vmem:[#allocation5 + $0x48] sm:$0xff]
    %v169 = vld [vmem:[#allocation5 + $0x50] sm:$0xff]
    %v170 = vld [vmem:[#allocation5 + $0x58] sm:$0xff]
    %v171 = vld [vmem:[#allocation5 + $0x60] sm:$0xff]
    %v172 = vld [vmem:[#allocation5 + $0x68] sm:$0xff]
    %v173 = vld [vmem:[#allocation5 + $0x70] sm:$0xff]
    %v174 = vld [vmem:[#allocation5 + $0x78] sm:$0xff]
    %v175 = vld [vmem:[#allocation5 + $0x80] sm:$0xff]
    %v176 = vld [vmem:[#allocation5 + $0x88] sm:$0xff]
    %v177 = vld [vmem:[#allocation5 + $0x90] sm:$0xff]
    %v178 = vld [vmem:[#allocation5 + $0x98] sm:$0xff]
    %v179 = vld [vmem:[#allocation5 + $0xa0] sm:$0xff]
    %v180 = vld [vmem:[#allocation5 + $0xa8] sm:$0xff]
    %v181 = vld [vmem:[#allocation5 + $0xb0] sm:$0xff]
    %v182 = vld [vmem:[#allocation5 + $0xb8] sm:$0xff]
    %v183 = vld [vmem:[#allocation5 + $0xc0] sm:$0xff]
    %v184 = vld [vmem:[#allocation5 + $0xc8] sm:$0xff]
    %v185 = vld [vmem:[#allocation5 + $0xd0] sm:$0xff]
    %v186 = vld [vmem:[#allocation5 + $0xd8] sm:$0xff]
    %v187 = vld [vmem:[#allocation5 + $0xe0] sm:$0xff]
    %v188 = vld [vmem:[#allocation5 + $0xe8] sm:$0xff]
    %v189 = vld [vmem:[#allocation5 + $0xf0] sm:$0xff]
    %v190 = vld [vmem:[#allocation5 + $0xf8] sm:$0xff]
    %v191 = vld [vmem:[#allocation5 + $0x388] sm:$0x1]
    %v192 = vlaneseq
    %v193 = vshrl.u32 %v192, 7
    %v194 = vsub.s32 0, %v193
    %v195 = vrot.slane %v191, %v194
    %196 = vmatprep.subr.mxu0 0.0
    %197 = vmatpush1.msra.mxu0 %v159
    %198 = vmatprep.subr.mxu0 0.0
    %199 = vmatpush1.msra.mxu0 %v160
    %200 = vmatprep.subr.mxu0 0.0
    %201 = vmatpush1.msra.mxu0 %v161
    %202 = vmatprep.subr.mxu0 0.0
    %203 = vmatpush1.msra.mxu0 %v162
    %204 = vmatprep.subr.mxu0 0.0
    %205 = vmatpush1.msra.mxu0 %v163
    %206 = vmatprep.subr.mxu0 0.0
    %207 = vmatpush1.msra.mxu0 %v164
    %208 = vmatprep.subr.mxu0 0.0
    %209 = vmatpush1.msra.mxu0 %v165
    %210 = vmatprep.subr.mxu0 0.0
    %211 = vmatpush1.msra.mxu0 %v166
    %212 = vmatprep.subr.mxu0 0.0
    %213 = vmatpush1.msra.mxu0 %v167
    %214 = vmatprep.subr.mxu0 0.0
    %215 = vmatpush1.msra.mxu0 %v168
    %216 = vmatprep.subr.mxu0 0.0
    %217 = vmatpush1.msra.mxu0 %v169
    %218 = vmatprep.subr.mxu0 0.0
    %219 = vmatpush1.msra.mxu0 %v170
    %220 = vmatprep.subr.mxu0 0.0
    %221 = vmatpush1.msra.mxu0 %v171
    %222 = vmatprep.subr.mxu0 0.0
    %223 = vmatpush1.msra.mxu0 %v172
    %224 = vmatprep.subr.mxu0 0.0
    %225 = vmatpush1.msra.mxu0 %v173
    %226 = vmatprep.subr.mxu0 0.0
    %227 = vmatpush1.msra.mxu0 %v174
    %228 = vmatprep.subr.mxu0 0.0
    %229 = vmatpush1.msra.mxu0 %v175
    %230 = vmatprep.subr.mxu0 0.0
    %231 = vmatpush1.msra.mxu0 %v176
    %232 = vmatprep.subr.mxu0 0.0
    %233 = vmatpush1.msra.mxu0 %v177
    %234 = vmatprep.subr.mxu0 0.0
    %235 = vmatpush1.msra.mxu0 %v178
    %236 = vmatprep.subr.mxu0 0.0
    %237 = vmatpush1.msra.mxu0 %v179
    %238 = vmatprep.subr.mxu0 0.0
    %239 = vmatpush1.msra.mxu0 %v180
    %240 = vmatprep.subr.mxu0 0.0
    %241 = vmatpush1.msra.mxu0 %v181
    %242 = vmatprep.subr.mxu0 0.0
    %243 = vmatpush1.msra.mxu0 %v182
    %244 = vmatprep.subr.mxu0 0.0
    %245 = vmatpush1.msra.mxu0 %v183
    %246 = vmatprep.subr.mxu0 0.0
    %247 = vmatpush1.msra.mxu0 %v184
    %248 = vmatprep.subr.mxu0 0.0
    %249 = vmatpush1.msra.mxu0 %v185
    %250 = vmatprep.subr.mxu0 0.0
    %251 = vmatpush1.msra.mxu0 %v186
    %252 = vmatprep.subr.mxu0 0.0
    %253 = vmatpush1.msra.mxu0 %v187
    %254 = vmatprep.subr.mxu0 0.0
    %255 = vmatpush1.msra.mxu0 %v188
    %256 = vmatprep.subr.mxu0 0.0
    %257 = vmatpush1.msra.mxu0 %v189
    %258 = vmatprep.subr.mxu0 0.0
    %259 = vmatpush1.msra.mxu0 %v190
    %260 = vmatprep.mubr.f32.mxu0 %v55
    %261 = vmatmul.mubr.f32.gmra.mrb[0].mxu0 %v156
    %v262 = vpop.f32.mrb[0].mxu0
    %v263 = vadd.f32 %v195, %v262
    %v264 = vpop.f32.mrb[0].mxu0
    %265 = vdwg.mxu0
    %v266 = vmax.f32 %v263, 0.0
    %267 = vst [vmem:[#allocation8] sm:$0xff] %v266
    %v268 = vld [vmem:[%s4] sm:$0xff]
    %v269 = vld [vmem:[%s4 + $0x8] sm:$0xff]
    %v270 = vld [vmem:[%s4 + $0x10] sm:$0xff]
    %v271 = vld [vmem:[%s4 + $0x18] sm:$0xff]
    %v272 = vld [vmem:[%s4 + $0x20] sm:$0xff]
    %v273 = vld [vmem:[%s4 + $0x28] sm:$0xff]
    %v274 = vld [vmem:[%s4 + $0x30] sm:$0xff]
    %v275 = vld [vmem:[%s4 + $0x38] sm:$0xff]
    %v276 = vld [vmem:[%s4 + $0x40] sm:$0xff]
    %v277 = vld [vmem:[%s4 + $0x48] sm:$0xff]
    %v278 = vld [vmem:[%s4 + $0x50] sm:$0xff]
    %v279 = vld [vmem:[%s4 + $0x58] sm:$0xff]
    %v280 = vld [vmem:[%s4 + $0x60] sm:$0xff]
    %v281 = vld [vmem:[%s4 + $0x68] sm:$0xff]
    %v282 = vld [vmem:[%s4 + $0x70] sm:$0xff]
    %v283 = vld [vmem:[%s4 + $0x78] sm:$0xff]
    %v284 = vld [vmem:[%s4 + $0x80] sm:$0xff]
    %v285 = vld [vmem:[%s4 + $0x88] sm:$0xff]
    %v286 = vld [vmem:[%s4 + $0x90] sm:$0xff]
    %v287 = vld [vmem:[%s4 + $0x98] sm:$0xff]
    %v288 = vld [vmem:[%s4 + $0xa0] sm:$0xff]
    %v289 = vld [vmem:[%s4 + $0xa8] sm:$0xff]
    %v290 = vld [vmem:[%s4 + $0xb0] sm:$0xff]
    %v291 = vld [vmem:[%s4 + $0xb8] sm:$0xff]
    %v292 = vld [vmem:[%s4 + $0xc0] sm:$0xff]
    %v293 = vld [vmem:[%s4 + $0xc8] sm:$0xff]
    %v294 = vld [vmem:[%s4 + $0xd0] sm:$0xff]
    %v295 = vld [vmem:[%s4 + $0xd8] sm:$0xff]
    %v296 = vld [vmem:[%s4 + $0xe0] sm:$0xff]
    %v297 = vld [vmem:[%s4 + $0xe8] sm:$0xff]
    %v298 = vld [vmem:[%s4 + $0xf0] sm:$0xff]
    %v299 = vld [vmem:[%s4 + $0xf8] sm:$0xff]
    %300 = vmatprep.subr.mxu0 %v269
    %301 = vmatpush1.msra.mxu0 %v268
    %302 = vmatprep.subr.mxu0 %v271
    %303 = vmatpush1.msra.mxu0 %v270
    %304 = vmatprep.subr.mxu0 %v273
    %305 = vmatpush1.msra.mxu0 %v272
    %306 = vmatprep.subr.mxu0 %v275
    %307 = vmatpush1.msra.mxu0 %v274
    %308 = vmatprep.subr.mxu0 %v277
    %309 = vmatpush1.msra.mxu0 %v276
    %310 = vmatprep.subr.mxu0 %v279
    %311 = vmatpush1.msra.mxu0 %v278
    %312 = vmatprep.subr.mxu0 %v281
    %313 = vmatpush1.msra.mxu0 %v280
    %314 = vmatprep.subr.mxu0 %v283
    %315 = vmatpush1.msra.mxu0 %v282
    %316 = vmatprep.subr.mxu0 %v285
    %317 = vmatpush1.msra.mxu0 %v284
    %318 = vmatprep.subr.mxu0 %v287
    %319 = vmatpush1.msra.mxu0 %v286
    %320 = vmatprep.subr.mxu0 %v289
    %321 = vmatpush1.msra.mxu0 %v288
    %322 = vmatprep.subr.mxu0 %v291
    %323 = vmatpush1.msra.mxu0 %v290
    %324 = vmatprep.subr.mxu0 %v293
    %325 = vmatpush1.msra.mxu0 %v292
    %326 = vmatprep.subr.mxu0 %v295
    %327 = vmatpush1.msra.mxu0 %v294
    %328 = vmatprep.subr.mxu0 %v297
    %329 = vmatpush1.msra.mxu0 %v296
    %330 = vmatprep.subr.mxu0 %v299
    %331 = vmatpush1.msra.mxu0 %v298
    %332 = vmatprep.subr.mxu0 0.0
    %333 = vmatpush1.msra.mxu0 0.0
    %334 = vmatprep.subr.mxu0 0.0
    %335 = vmatpush1.msra.mxu0 0.0
    %336 = vmatprep.subr.mxu0 0.0
    %337 = vmatpush1.msra.mxu0 0.0
    %338 = vmatprep.subr.mxu0 0.0
    %339 = vmatpush1.msra.mxu0 0.0
    %340 = vmatprep.subr.mxu0 0.0
    %341 = vmatpush1.msra.mxu0 0.0
    %342 = vmatprep.subr.mxu0 0.0
    %343 = vmatpush1.msra.mxu0 0.0
    %344 = vmatprep.subr.mxu0 0.0
    %345 = vmatpush1.msra.mxu0 0.0
    %346 = vmatprep.subr.mxu0 0.0
    %347 = vmatpush1.msra.mxu0 0.0
    %348 = vmatprep.subr.mxu0 0.0
    %349 = vmatpush1.msra.mxu0 0.0
    %350 = vmatprep.subr.mxu0 0.0
    %351 = vmatpush1.msra.mxu0 0.0
    %352 = vmatprep.subr.mxu0 0.0
    %353 = vmatpush1.msra.mxu0 0.0
    %354 = vmatprep.subr.mxu0 0.0
    %355 = vmatpush1.msra.mxu0 0.0
    %356 = vmatprep.subr.mxu0 0.0
    %357 = vmatpush1.msra.mxu0 0.0
    %358 = vmatprep.subr.mxu0 0.0
    %359 = vmatpush1.msra.mxu0 0.0
    %360 = vmatprep.subr.mxu0 0.0
    %361 = vmatpush1.msra.mxu0 0.0
    %362 = vmatprep.subr.mxu0 0.0
    %363 = vmatpush1.msra.mxu0 0.0
    %364 = vmatprep.mubr.f32.mxu0 0.0
    %365 = vmatmul.mubr.f32.gmra.mrb[0].mxu0 %v54
    %v366 = vpop.f32.mrb[0].mxu0
    %v367 = vadd.f32 0.0, %v366
    %v368 = vpop.f32.mrb[0].mxu0
    %v369 = vadd.f32 0.0, %v368
    %370 = vdwg.mxu0
    %v371 = vld [vmem:[#allocation5 + $0x389] sm:$0x1]
    %v372 = vlaneseq
    %v373 = vshrl.u32 %v372, 7
    %v374 = vsub.s32 0, %v373
    %v375 = vrot.slane %v371, %v374
    %v376 = vadd.f32 %v367, %v375
    %v377 = vld [vmem:[#allocation5 + $0x38a] sm:$0x1]
    %v378 = vlaneseq
    %v379 = vshrl.u32 %v378, 7
    %v380 = vsub.s32 0, %v379
    %v381 = vrot.slane %v377, %v380
    %v382 = vadd.f32 %v369, %v381
    %v384 = vsel %vm85, %v58, 0
    %v387 = vsel %vm85, %v59, 0
    %389 = vmatprep.subr.mxu0 0.0
    %390 = vmatpush1.msra.mxu0 %v376
    %391 = vmatprep.subr.mxu0 0.0
    %392 = vmatpush1.msra.mxu0 0.0
    %393 = vmatprep.subr.mxu0 0.0
    %394 = vmatpush1.msra.mxu0 0.0
    %395 = vmatprep.subr.mxu0 0.0
    %396 = vmatpush1.msra.mxu0 0.0
    %397 = vmatprep.subr.mxu0 0.0
    %398 = vmatpush1.msra.mxu0 0.0
    %399 = vmatprep.subr.mxu0 0.0
    %400 = vmatpush1.msra.mxu0 0.0
    %401 = vmatprep.subr.mxu0 0.0
    %402 = vmatpush1.msra.mxu0 0.0
    %403 = vmatprep.subr.mxu0 0.0
    %404 = vmatpush1.msra.mxu0 0.0
    %405 = vmatprep.subr.mxu0 0.0
    %406 = vmatpush1.msra.mxu0 0.0
    %407 = vmatprep.subr.mxu0 0.0
    %408 = vmatpush1.msra.mxu0 0.0
    %409 = vmatprep.subr.mxu0 0.0
    %410 = vmatpush1.msra.mxu0 0.0
    %411 = vmatprep.subr.mxu0 0.0
    %412 = vmatpush1.msra.mxu0 0.0
    %413 = vmatprep.subr.mxu0 0.0
    %414 = vmatpush1.msra.mxu0 0.0
    %415 = vmatprep.subr.mxu0 0.0
    %416 = vmatpush1.msra.mxu0 0.0
    %417 = vmatprep.subr.mxu0 0.0
    %418 = vmatpush1.msra.mxu0 0.0
    %419 = vmatprep.subr.mxu0 0.0
    %420 = vmatpush1.msra.mxu0 0.0
    %421 = vmatprep.subr.mxu0 0.0
    %422 = vmatpush1.msra.mxu0 0.0
    %423 = vmatprep.subr.mxu0 0.0
    %424 = vmatpush1.msra.mxu0 0.0
    %425 = vmatprep.subr.mxu0 0.0
    %426 = vmatpush1.msra.mxu0 0.0
    %427 = vmatprep.subr.mxu0 0.0
    %428 = vmatpush1.msra.mxu0 0.0
    %429 = vmatprep.subr.mxu0 0.0
    %430 = vmatpush1.msra.mxu0 0.0
    %431 = vmatprep.subr.mxu0 0.0
    %432 = vmatpush1.msra.mxu0 0.0
    %433 = vmatprep.subr.mxu0 0.0
    %434 = vmatpush1.msra.mxu0 0.0
    %435 = vmatprep.subr.mxu0 0.0
    %436 = vmatpush1.msra.mxu0 0.0
    %437 = vmatprep.subr.mxu0 0.0
    %438 = vmatpush1.msra.mxu0 0.0
    %439 = vmatprep.subr.mxu0 0.0
    %440 = vmatpush1.msra.mxu0 0.0
    %441 = vmatprep.subr.mxu0 0.0
    %442 = vmatpush1.msra.mxu0 0.0
    %443 = vmatprep.subr.mxu0 0.0
    %444 = vmatpush1.msra.mxu0 0.0
    %445 = vmatprep.subr.mxu0 0.0
    %446 = vmatpush1.msra.mxu0 0.0
    %447 = vmatprep.subr.mxu0 0.0
    %448 = vmatpush1.msra.mxu0 0.0
    %449 = vmatprep.subr.mxu0 0.0
    %450 = vmatpush1.msra.mxu0 0.0
    %451 = vmatprep.subr.mxu0 0.0
    %452 = vmatpush1.msra.mxu0 0.0
    %453 = vmatprep.mubr.f32.mxu0 0.0
    %454 = vmatmul.mubr.f32.gmra.mrb[0].mxu0 %v384
    %v455 = vpop.f32.mrb[0].mxu0
    %v456 = vadd.f32 0.0, %v455
    %v457 = vpop.f32.mrb[0].mxu0
    %458 = vmatprep.mubr.f32.mxu0 0.0
    %459 = vmatmul.mubr.f32.gmra.mrb[0].mxu0 %v387
    %v460 = vpop.f32.mrb[0].mxu0
    %v461 = vadd.f32 0.0, %v460
    %v462 = vpop.f32.mrb[0].mxu0
    %463 = vdwg.mxu0
    %v465 = vsel %vm85, %v60, 0
    %v468 = vsel %vm85, %v61, 0
    %470 = vmatprep.subr.mxu0 0.0
    %471 = vmatpush1.msra.mxu0 %v382
    %472 = vmatprep.subr.mxu0 0.0
    %473 = vmatpush1.msra.mxu0 0.0
    %474 = vmatprep.subr.mxu0 0.0
    %475 = vmatpush1.msra.mxu0 0.0
    %476 = vmatprep.subr.mxu0 0.0
    %477 = vmatpush1.msra.mxu0 0.0
    %478 = vmatprep.subr.mxu0 0.0
    %479 = vmatpush1.msra.mxu0 0.0
    %480 = vmatprep.subr.mxu0 0.0
    %481 = vmatpush1.msra.mxu0 0.0
    %482 = vmatprep.subr.mxu0 0.0
    %483 = vmatpush1.msra.mxu0 0.0
    %484 = vmatprep.subr.mxu0 0.0
    %485 = vmatpush1.msra.mxu0 0.0
    %486 = vmatprep.subr.mxu0 0.0
    %487 = vmatpush1.msra.mxu0 0.0
    %488 = vmatprep.subr.mxu0 0.0
    %489 = vmatpush1.msra.mxu0 0.0
    %490 = vmatprep.subr.mxu0 0.0
    %491 = vmatpush1.msra.mxu0 0.0
    %492 = vmatprep.subr.mxu0 0.0
    %493 = vmatpush1.msra.mxu0 0.0
    %494 = vmatprep.subr.mxu0 0.0
    %495 = vmatpush1.msra.mxu0 0.0
    %496 = vmatprep.subr.mxu0 0.0
    %497 = vmatpush1.msra.mxu0 0.0
    %498 = vmatprep.subr.mxu0 0.0
    %499 = vmatpush1.msra.mxu0 0.0
    %500 = vmatprep.subr.mxu0 0.0
    %501 = vmatpush1.msra.mxu0 0.0
    %502 = vmatprep.subr.mxu0 0.0
    %503 = vmatpush1.msra.mxu0 0.0
    %504 = vmatprep.subr.mxu0 0.0
    %505 = vmatpush1.msra.mxu0 0.0
    %506 = vmatprep.subr.mxu0 0.0
    %507 = vmatpush1.msra.mxu0 0.0
    %508 = vmatprep.subr.mxu0 0.0
    %509 = vmatpush1.msra.mxu0 0.0
    %510 = vmatprep.subr.mxu0 0.0
    %511 = vmatpush1.msra.mxu0 0.0
    %512 = vmatprep.subr.mxu0 0.0
    %513 = vmatpush1.msra.mxu0 0.0
    %514 = vmatprep.subr.mxu0 0.0
    %515 = vmatpush1.msra.mxu0 0.0
    %516 = vmatprep.subr.mxu0 0.0
    %517 = vmatpush1.msra.mxu0 0.0
    %518 = vmatprep.subr.mxu0 0.0
    %519 = vmatpush1.msra.mxu0 0.0
    %520 = vmatprep.subr.mxu0 0.0
    %521 = vmatpush1.msra.mxu0 0.0
    %522 = vmatprep.subr.mxu0 0.0
    %523 = vmatpush1.msra.mxu0 0.0
    %524 = vmatprep.subr.mxu0 0.0
    %525 = vmatpush1.msra.mxu0 0.0
    %526 = vmatprep.subr.mxu0 0.0
    %527 = vmatpush1.msra.mxu0 0.0
    %528 = vmatprep.subr.mxu0 0.0
    %529 = vmatpush1.msra.mxu0 0.0
    %530 = vmatprep.subr.mxu0 0.0
    %531 = vmatpush1.msra.mxu0 0.0
    %532 = vmatprep.subr.mxu0 0.0
    %533 = vmatpush1.msra.mxu0 0.0
    %534 = vmatprep.mubr.f32.mxu0 0.0
    %535 = vmatmul.mubr.f32.gmra.mrb[0].mxu0 %v465
    %v536 = vpop.f32.mrb[0].mxu0
    %v537 = vadd.f32 0.0, %v536
    %v538 = vpop.f32.mrb[0].mxu0
    %539 = vmatprep.mubr.f32.mxu0 0.0
    %540 = vmatmul.mubr.f32.gmra.mrb[0].mxu0 %v468
    %v541 = vpop.f32.mrb[0].mxu0
    %v542 = vadd.f32 0.0, %v541
    %v543 = vpop.f32.mrb[0].mxu0
    %544 = vdwg.mxu0
    %v545 = vld [vmem:[#allocation5 + $0x300] sm:$0xff]
    %v546 = vld [vmem:[#allocation5 + $0x308] sm:$0xff]
    %v547 = vld [vmem:[#allocation5 + $0x310] sm:$0xff]
    %v548 = vld [vmem:[#allocation5 + $0x318] sm:$0xff]
    %v549 = vld [vmem:[#allocation5 + $0x320] sm:$0xff]
    %v550 = vld [vmem:[#allocation5 + $0x328] sm:$0xff]
    %v551 = vld [vmem:[#allocation5 + $0x330] sm:$0xff]
    %v552 = vld [vmem:[#allocation5 + $0x338] sm:$0xff]
    %v553 = vld [vmem:[#allocation5 + $0x340] sm:$0xff]
    %v554 = vld [vmem:[#allocation5 + $0x348] sm:$0xff]
    %v555 = vld [vmem:[#allocation5 + $0x350] sm:$0xff]
    %v556 = vld [vmem:[#allocation5 + $0x358] sm:$0xff]
    %v557 = vld [vmem:[#allocation5 + $0x360] sm:$0xff]
    %v558 = vld [vmem:[#allocation5 + $0x368] sm:$0xff]
    %v559 = vld [vmem:[#allocation5 + $0x370] sm:$0xff]
    %v560 = vld [vmem:[#allocation5 + $0x378] sm:$0xff]
    %561 = vmatprep.subr.mxu0 0.0
    %562 = vmatpush1.msra.mxu0 %v545
    %563 = vmatprep.subr.mxu0 0.0
    %564 = vmatpush1.msra.mxu0 %v546
    %565 = vmatprep.subr.mxu0 0.0
    %566 = vmatpush1.msra.mxu0 %v547
    %567 = vmatprep.subr.mxu0 0.0
    %568 = vmatpush1.msra.mxu0 %v548
    %569 = vmatprep.subr.mxu0 0.0
    %570 = vmatpush1.msra.mxu0 %v549
    %571 = vmatprep.subr.mxu0 0.0
    %572 = vmatpush1.msra.mxu0 %v550
    %573 = vmatprep.subr.mxu0 0.0
    %574 = vmatpush1.msra.mxu0 %v551
    %575 = vmatprep.subr.mxu0 0.0
    %576 = vmatpush1.msra.mxu0 %v552
    %577 = vmatprep.subr.mxu0 0.0
    %578 = vmatpush1.msra.mxu0 %v553
    %579 = vmatprep.subr.mxu0 0.0
    %580 = vmatpush1.msra.mxu0 %v554
    %581 = vmatprep.subr.mxu0 0.0
    %582 = vmatpush1.msra.mxu0 %v555
    %583 = vmatprep.subr.mxu0 0.0
    %584 = vmatpush1.msra.mxu0 %v556
    %585 = vmatprep.subr.mxu0 0.0
    %586 = vmatpush1.msra.mxu0 %v557
    %587 = vmatprep.subr.mxu0 0.0
    %588 = vmatpush1.msra.mxu0 %v558
    %589 = vmatprep.subr.mxu0 0.0
    %590 = vmatpush1.msra.mxu0 %v559
    %591 = vmatprep.subr.mxu0 0.0
    %592 = vmatpush1.msra.mxu0 %v560
    %593 = vmatprep.subr.mxu0 0.0
    %594 = vmatpush1.msra.mxu0 0.0
    %595 = vmatprep.subr.mxu0 0.0
    %596 = vmatpush1.msra.mxu0 0.0
    %597 = vmatprep.subr.mxu0 0.0
    %598 = vmatpush1.msra.mxu0 0.0
    %599 = vmatprep.subr.mxu0 0.0
    %600 = vmatpush1.msra.mxu0 0.0
    %601 = vmatprep.subr.mxu0 0.0
    %602 = vmatpush1.msra.mxu0 0.0
    %603 = vmatprep.subr.mxu0 0.0
    %604 = vmatpush1.msra.mxu0 0.0
    %605 = vmatprep.subr.mxu0 0.0
    %606 = vmatpush1.msra.mxu0 0.0
    %607 = vmatprep.subr.mxu0 0.0
    %608 = vmatpush1.msra.mxu0 0.0
    %609 = vmatprep.subr.mxu0 0.0
    %610 = vmatpush1.msra.mxu0 0.0
    %611 = vmatprep.subr.mxu0 0.0
    %612 = vmatpush1.msra.mxu0 0.0
    %613 = vmatprep.subr.mxu0 0.0
    %614 = vmatpush1.msra.mxu0 0.0
    %615 = vmatprep.subr.mxu0 0.0
    %616 = vmatpush1.msra.mxu0 0.0
    %617 = vmatprep.subr.mxu0 0.0
    %618 = vmatpush1.msra.mxu0 0.0
    %619 = vmatprep.subr.mxu0 0.0
    %620 = vmatpush1.msra.mxu0 0.0
    %621 = vmatprep.subr.mxu0 0.0
    %622 = vmatpush1.msra.mxu0 0.0
    %623 = vmatprep.subr.mxu0 0.0
    %624 = vmatpush1.msra.mxu0 0.0
    %625 = vmatprep.mubr.f32.mxu0 0.0
    %626 = vmatmul.mubr.f32.gmra.mrb[0].mxu0 %v266
    %v627 = vpop.f32.mrb[0].mxu0
    %v628 = vadd.f32 0.0, %v627
    %v629 = vpop.f32.mrb[0].mxu0
    %630 = vdwg.mxu0
    %v632 = vsel %vm85, %v62, 0
    %v635 = vsel %vm85, %v63, 0
    %637 = vmatprep.subr.mxu0 0.0
    %638 = vmatpush1.msra.mxu0 %v628
    %639 = vmatprep.subr.mxu0 0.0
    %640 = vmatpush1.msra.mxu0 0.0
    %641 = vmatprep.subr.mxu0 0.0
    %642 = vmatpush1.msra.mxu0 0.0
    %643 = vmatprep.subr.mxu0 0.0
    %644 = vmatpush1.msra.mxu0 0.0
    %645 = vmatprep.subr.mxu0 0.0
    %646 = vmatpush1.msra.mxu0 0.0
    %647 = vmatprep.subr.mxu0 0.0
    %648 = vmatpush1.msra.mxu0 0.0
    %649 = vmatprep.subr.mxu0 0.0
    %650 = vmatpush1.msra.mxu0 0.0
    %651 = vmatprep.subr.mxu0 0.0
    %652 = vmatpush1.msra.mxu0 0.0
    %653 = vmatprep.subr.mxu0 0.0
    %654 = vmatpush1.msra.mxu0 0.0
    %655 = vmatprep.subr.mxu0 0.0
    %656 = vmatpush1.msra.mxu0 0.0
    %657 = vmatprep.subr.mxu0 0.0
    %658 = vmatpush1.msra.mxu0 0.0
    %659 = vmatprep.subr.mxu0 0.0
    %660 = vmatpush1.msra.mxu0 0.0
    %661 = vmatprep.subr.mxu0 0.0
    %662 = vmatpush1.msra.mxu0 0.0
    %663 = vmatprep.subr.mxu0 0.0
    %664 = vmatpush1.msra.mxu0 0.0
    %665 = vmatprep.subr.mxu0 0.0
    %666 = vmatpush1.msra.mxu0 0.0
    %667 = vmatprep.subr.mxu0 0.0
    %668 = vmatpush1.msra.mxu0 0.0
    %669 = vmatprep.subr.mxu0 0.0
    %670 = vmatpush1.msra.mxu0 0.0
    %671 = vmatprep.subr.mxu0 0.0
    %672 = vmatpush1.msra.mxu0 0.0
    %673 = vmatprep.subr.mxu0 0.0
    %674 = vmatpush1.msra.mxu0 0.0
    %675 = vmatprep.subr.mxu0 0.0
    %676 = vmatpush1.msra.mxu0 0.0
    %677 = vmatprep.subr.mxu0 0.0
    %678 = vmatpush1.msra.mxu0 0.0
    %679 = vmatprep.subr.mxu0 0.0
    %680 = vmatpush1.msra.mxu0 0.0
    %681 = vmatprep.subr.mxu0 0.0
    %682 = vmatpush1.msra.mxu0 0.0
    %683 = vmatprep.subr.mxu0 0.0
    %684 = vmatpush1.msra.mxu0 0.0
    %685 = vmatprep.subr.mxu0 0.0
    %686 = vmatpush1.msra.mxu0 0.0
    %687 = vmatprep.subr.mxu0 0.0
    %688 = vmatpush1.msra.mxu0 0.0
    %689 = vmatprep.subr.mxu0 0.0
    %690 = vmatpush1.msra.mxu0 0.0
    %691 = vmatprep.subr.mxu0 0.0
    %692 = vmatpush1.msra.mxu0 0.0
    %693 = vmatprep.subr.mxu0 0.0
    %694 = vmatpush1.msra.mxu0 0.0
    %695 = vmatprep.subr.mxu0 0.0
    %696 = vmatpush1.msra.mxu0 0.0
    %697 = vmatprep.subr.mxu0 0.0
    %698 = vmatpush1.msra.mxu0 0.0
    %699 = vmatprep.subr.mxu0 0.0
    %700 = vmatpush1.msra.mxu0 0.0
    %701 = vmatprep.mubr.f32.mxu0 0.0
    %702 = vmatmul.mubr.f32.gmra.mrb[0].mxu0 %v632
    %v703 = vpop.f32.mrb[0].mxu0
    %v704 = vadd.f32 0.0, %v703
    %v705 = vpop.f32.mrb[0].mxu0
    %706 = vmatprep.mubr.f32.mxu0 0.0
    %707 = vmatmul.mubr.f32.gmra.mrb[0].mxu0 %v635
    %v708 = vpop.f32.mrb[0].mxu0
    %v709 = vadd.f32 0.0, %v708
    %v710 = vpop.f32.mrb[0].mxu0
    %711 = vdwg.mxu0
    %v712 = vadd.f32 %v456, %v537
    %v713 = vadd.f32 %v461, %v542
    %v714 = vadd.f32 %v712, %v704
    %v715 = vadd.f32 %v713, %v709
    %vm716 = vcmp.gt.f32.partialorder %v714, 0.0
    %vm717 = vcmp.gt.f32.partialorder %v715, 0.0
    %v718 = vmul.f32 %v714, 0.2
    %v719 = vmul.f32 %v715, 0.2
    %v720 = vsel %vm716, %v714, %v718
    %v721 = vsel %vm717, %v715, %v719
    %722 = vmatprep.subr.mxu0 0.0
    %723 = vmatpush1.msra.mxu0 %v69
    %724 = vmatprep.subr.mxu0 0.0
    %725 = vmatpush1.msra.mxu0 %v70
    %726 = vmatprep.subr.mxu0 0.0
    %727 = vmatpush1.msra.mxu0 %v71
    %728 = vmatprep.subr.mxu0 0.0
    %729 = vmatpush1.msra.mxu0 %v72
    %730 = vmatprep.subr.mxu0 0.0
    %731 = vmatpush1.msra.mxu0 %v73
    %732 = vmatprep.subr.mxu0 0.0
    %733 = vmatpush1.msra.mxu0 %v74
    %734 = vmatprep.subr.mxu0 0.0
    %735 = vmatpush1.msra.mxu0 %v75
    %736 = vmatprep.subr.mxu0 0.0
    %737 = vmatpush1.msra.mxu0 %v76
    %738 = vmatprep.subr.mxu0 0.0
    %739 = vmatpush1.msra.mxu0 %v77
    %740 = vmatprep.subr.mxu0 0.0
    %741 = vmatpush1.msra.mxu0 %v78
    %742 = vmatprep.subr.mxu0 0.0
    %743 = vmatpush1.msra.mxu0 %v79
    %744 = vmatprep.subr.mxu0 0.0
    %745 = vmatpush1.msra.mxu0 %v80
    %746 = vmatprep.subr.mxu0 0.0
    %747 = vmatpush1.msra.mxu0 %v81
    %748 = vmatprep.subr.mxu0 0.0
    %749 = vmatpush1.msra.mxu0 %v82
    %750 = vmatprep.subr.mxu0 0.0
    %751 = vmatpush1.msra.mxu0 %v83
    %752 = vmatprep.subr.mxu0 0.0
    %753 = vmatpush1.msra.mxu0 %v84
    %754 = vmatprep.subr.mxu0 0.0
    %755 = vmatpush1.msra.mxu0 0.0
    %756 = vmatprep.subr.mxu0 0.0
    %757 = vmatpush1.msra.mxu0 0.0
    %758 = vmatprep.subr.mxu0 0.0
    %759 = vmatpush1.msra.mxu0 0.0
    %760 = vmatprep.subr.mxu0 0.0
    %761 = vmatpush1.msra.mxu0 0.0
    %762 = vmatprep.subr.mxu0 0.0
    %763 = vmatpush1.msra.mxu0 0.0
    %764 = vmatprep.subr.mxu0 0.0
    %765 = vmatpush1.msra.mxu0 0.0
    %766 = vmatprep.subr.mxu0 0.0
    %767 = vmatpush1.msra.mxu0 0.0
    %768 = vmatprep.subr.mxu0 0.0
    %769 = vmatpush1.msra.mxu0 0.0
    %770 = vmatprep.subr.mxu0 0.0
    %771 = vmatpush1.msra.mxu0 0.0
    %772 = vmatprep.subr.mxu0 0.0
    %773 = vmatpush1.msra.mxu0 0.0
    %774 = vmatprep.subr.mxu0 0.0
    %775 = vmatpush1.msra.mxu0 0.0
    %776 = vmatprep.subr.mxu0 0.0
    %777 = vmatpush1.msra.mxu0 0.0
    %778 = vmatprep.subr.mxu0 0.0
    %779 = vmatpush1.msra.mxu0 0.0
    %780 = vmatprep.subr.mxu0 0.0
    %781 = vmatpush1.msra.mxu0 0.0
    %782 = vmatprep.subr.mxu0 0.0
    %783 = vmatpush1.msra.mxu0 0.0
    %784 = vmatprep.subr.mxu0 0.0
    %785 = vmatpush1.msra.mxu0 0.0
    %786 = vmatprep.mubr.f32.mxu0 0.0
    %787 = vmatmul.mubr.f32.gmra.mrb[0].mxu0 %v720
    %v788 = vpop.f32.mrb[0].mxu0
    %v789 = vadd.f32 %v67, %v788
    %v790 = vpop.f32.mrb[0].mxu0
    %791 = vmatprep.mubr.f32.mxu0 0.0
    %792 = vmatmul.mubr.f32.gmra.mrb[0].mxu0 %v721
    %v793 = vpop.f32.mrb[0].mxu0
    %v794 = vadd.f32 %v68, %v793
    %v795 = vpop.f32.mrb[0].mxu0
    %796 = vdwg.mxu0
    %v797 = vsel %vm85, %v789, -inf
    %v798 = vsel %vm85, %v794, -inf
    %v799 = vmax.f32 %v797, %v798
    %v800 = vrot.slane %v799, 4
    %v801 = vmax.f32 %v799, %v800
    %v802 = vrot.slane %v801, 2
    %v803 = vmax.f32 %v801, %v802
    %v804 = vrot.slane %v803, 1
    %v805 = vmax.f32 %v803, %v804
    %v806 = vsub.f32 %v789, %v805
    %v807 = vsub.f32 %v794, %v805
    %v808 = vmul.f32 %v806, 1.442695
    %v809 = vpow.pop %v808
    %v810 = vmul.f32 %v807, 1.442695
    %v811 = vpow.pop %v810
    %vm812 = vcmask 130048
    %v814 = vsel %vm812, %v64, 0
    %816 = vmatprep.subr.mxu0 0.0
    %817 = vmatpush1.msra.mxu0 %v809
    %818 = vmatprep.subr.mxu0 0.0
    %819 = vmatpush1.msra.mxu0 %v811
    %820 = vmatprep.subr.mxu0 0.0
    %821 = vmatpush1.msra.mxu0 0.0
    %822 = vmatprep.subr.mxu0 0.0
    %823 = vmatpush1.msra.mxu0 0.0
    %824 = vmatprep.subr.mxu0 0.0
    %825 = vmatpush1.msra.mxu0 0.0
    %826 = vmatprep.subr.mxu0 0.0
    %827 = vmatpush1.msra.mxu0 0.0
    %828 = vmatprep.subr.mxu0 0.0
    %829 = vmatpush1.msra.mxu0 0.0
    %830 = vmatprep.subr.mxu0 0.0
    %831 = vmatpush1.msra.mxu0 0.0
    %832 = vmatprep.subr.mxu0 0.0
    %833 = vmatpush1.msra.mxu0 0.0
    %834 = vmatprep.subr.mxu0 0.0
    %835 = vmatpush1.msra.mxu0 0.0
    %836 = vmatprep.subr.mxu0 0.0
    %837 = vmatpush1.msra.mxu0 0.0
    %838 = vmatprep.subr.mxu0 0.0
    %839 = vmatpush1.msra.mxu0 0.0
    %840 = vmatprep.subr.mxu0 0.0
    %841 = vmatpush1.msra.mxu0 0.0
    %842 = vmatprep.subr.mxu0 0.0
    %843 = vmatpush1.msra.mxu0 0.0
    %844 = vmatprep.subr.mxu0 0.0
    %845 = vmatpush1.msra.mxu0 0.0
    %846 = vmatprep.subr.mxu0 0.0
    %847 = vmatpush1.msra.mxu0 0.0
    %848 = vmatprep.subr.mxu0 0.0
    %849 = vmatpush1.msra.mxu0 0.0
    %850 = vmatprep.subr.mxu0 0.0
    %851 = vmatpush1.msra.mxu0 0.0
    %852 = vmatprep.subr.mxu0 0.0
    %853 = vmatpush1.msra.mxu0 0.0
    %854 = vmatprep.subr.mxu0 0.0
    %855 = vmatpush1.msra.mxu0 0.0
    %856 = vmatprep.subr.mxu0 0.0
    %857 = vmatpush1.msra.mxu0 0.0
    %858 = vmatprep.subr.mxu0 0.0
    %859 = vmatpush1.msra.mxu0 0.0
    %860 = vmatprep.subr.mxu0 0.0
    %861 = vmatpush1.msra.mxu0 0.0
    %862 = vmatprep.subr.mxu0 0.0
    %863 = vmatpush1.msra.mxu0 0.0
    %864 = vmatprep.subr.mxu0 0.0
    %865 = vmatpush1.msra.mxu0 0.0
    %866 = vmatprep.subr.mxu0 0.0
    %867 = vmatpush1.msra.mxu0 0.0
    %868 = vmatprep.subr.mxu0 0.0
    %869 = vmatpush1.msra.mxu0 0.0
    %870 = vmatprep.subr.mxu0 0.0
    %871 = vmatpush1.msra.mxu0 0.0
    %872 = vmatprep.subr.mxu0 0.0
    %873 = vmatpush1.msra.mxu0 0.0
    %874 = vmatprep.subr.mxu0 0.0
    %875 = vmatpush1.msra.mxu0 0.0
    %876 = vmatprep.subr.mxu0 0.0
    %877 = vmatpush1.msra.mxu0 0.0
    %878 = vmatprep.subr.mxu0 0.0
    %879 = vmatpush1.msra.mxu0 0.0
    %880 = vmatprep.mubr.f32.mxu0 0.0
    %881 = vmatmul.mubr.f32.gmra.mrb[0].mxu0 %v814
    %v882 = vpop.f32.mrb[0].mxu0
    %v883 = vadd.f32 0.0, %v882
    %v884 = vpop.f32.mrb[0].mxu0
    %885 = vdwg.mxu0
    %886 = vmatprep.subr.mxu0 0.0
    %887 = vmatpush1.msra.mxu0 %v883
    %888 = vmatprep.subr.mxu0 0.0
    %889 = vmatpush1.msra.mxu0 0.0
    %890 = vmatprep.subr.mxu0 0.0
    %891 = vmatpush1.msra.mxu0 0.0
    %892 = vmatprep.subr.mxu0 0.0
    %893 = vmatpush1.msra.mxu0 0.0
    %894 = vmatprep.subr.mxu0 0.0
    %895 = vmatpush1.msra.mxu0 0.0
    %896 = vmatprep.subr.mxu0 0.0
    %897 = vmatpush1.msra.mxu0 0.0
    %898 = vmatprep.subr.mxu0 0.0
    %899 = vmatpush1.msra.mxu0 0.0
    %900 = vmatprep.subr.mxu0 0.0
    %901 = vmatpush1.msra.mxu0 0.0
    %902 = vmatprep.subr.mxu0 0.0
    %903 = vmatpush1.msra.mxu0 0.0
    %904 = vmatprep.subr.mxu0 0.0
    %905 = vmatpush1.msra.mxu0 0.0
    %906 = vmatprep.subr.mxu0 0.0
    %907 = vmatpush1.msra.mxu0 0.0
    %908 = vmatprep.subr.mxu0 0.0
    %909 = vmatpush1.msra.mxu0 0.0
    %910 = vmatprep.subr.mxu0 0.0
    %911 = vmatpush1.msra.mxu0 0.0
    %912 = vmatprep.subr.mxu0 0.0
    %913 = vmatpush1.msra.mxu0 0.0
    %914 = vmatprep.subr.mxu0 0.0
    %915 = vmatpush1.msra.mxu0 0.0
    %916 = vmatprep.subr.mxu0 0.0
    %917 = vmatpush1.msra.mxu0 0.0
    %918 = vmatprep.subr.mxu0 0.0
    %919 = vmatpush1.msra.mxu0 0.0
    %920 = vmatprep.subr.mxu0 0.0
    %921 = vmatpush1.msra.mxu0 0.0
    %922 = vmatprep.subr.mxu0 0.0
    %923 = vmatpush1.msra.mxu0 0.0
    %924 = vmatprep.subr.mxu0 0.0
    %925 = vmatpush1.msra.mxu0 0.0
    %926 = vmatprep.subr.mxu0 0.0
    %927 = vmatpush1.msra.mxu0 0.0
    %928 = vmatprep.subr.mxu0 0.0
    %929 = vmatpush1.msra.mxu0 0.0
    %930 = vmatprep.subr.mxu0 0.0
    %931 = vmatpush1.msra.mxu0 0.0
    %932 = vmatprep.subr.mxu0 0.0
    %933 = vmatpush1.msra.mxu0 0.0
    %934 = vmatprep.subr.mxu0 0.0
    %935 = vmatpush1.msra.mxu0 0.0
    %936 = vmatprep.subr.mxu0 0.0
    %937 = vmatpush1.msra.mxu0 0.0
    %938 = vmatprep.subr.mxu0 0.0
    %939 = vmatpush1.msra.mxu0 0.0
    %940 = vmatprep.subr.mxu0 0.0
    %941 = vmatpush1.msra.mxu0 0.0
    %942 = vmatprep.subr.mxu0 0.0
    %943 = vmatpush1.msra.mxu0 0.0
    %944 = vmatprep.subr.mxu0 0.0
    %945 = vmatpush1.msra.mxu0 0.0
    %946 = vmatprep.subr.mxu0 0.0
    %947 = vmatpush1.msra.mxu0 0.0
    %948 = vmatprep.subr.mxu0 0.0
    %949 = vmatpush1.msra.mxu0 0.0
    %950 = vmatprep.mubr.f32.mxu0 0.0
    %951 = vmatmul.mubr.f32.gmra.mrb[0].mxu0 %v465
    %v952 = vpop.f32.mrb[0].mxu0
    %v953 = vadd.f32 0.0, %v952
    %v954 = vpop.f32.mrb[0].mxu0
    %955 = vmatprep.mubr.f32.mxu0 0.0
    %956 = vmatmul.mubr.f32.gmra.mrb[0].mxu0 %v468
    %v957 = vpop.f32.mrb[0].mxu0
    %v958 = vadd.f32 0.0, %v957
    %v959 = vpop.f32.mrb[0].mxu0
    %960 = vdwg.mxu0
    %v961 = vmax.f32 %v953, 1e-20
    %v962 = vmax.f32 %v958, 1e-20
    %v963 = vrcp.pop %v961
    %v964 = vrcp.pop %v962
    %v965 = vmul.f32 %v809, %v963
    %v966 = vmul.f32 %v811, %v964
    %v967 = vld [vmem:[#allocation5 + $0x380] sm:$0xff]
    %v969 = vsel %vm85, %v965, 0
    %v972 = vsel %vm85, %v966, 0
    %974 = vmatprep.subr.mxu0 0.0
    %975 = vmatpush1.msra.mxu0 %v967
    %976 = vmatprep.subr.mxu0 0.0
    %977 = vmatpush1.msra.mxu0 0.0
    %978 = vmatprep.subr.mxu0 0.0
    %979 = vmatpush1.msra.mxu0 0.0
    %980 = vmatprep.subr.mxu0 0.0
    %981 = vmatpush1.msra.mxu0 0.0
    %982 = vmatprep.subr.mxu0 0.0
    %983 = vmatpush1.msra.mxu0 0.0
    %984 = vmatprep.subr.mxu0 0.0
    %985 = vmatpush1.msra.mxu0 0.0
    %986 = vmatprep.subr.mxu0 0.0
    %987 = vmatpush1.msra.mxu0 0.0
    %988 = vmatprep.subr.mxu0 0.0
    %989 = vmatpush1.msra.mxu0 0.0
    %990 = vmatprep.subr.mxu0 0.0
    %991 = vmatpush1.msra.mxu0 0.0
    %992 = vmatprep.subr.mxu0 0.0
    %993 = vmatpush1.msra.mxu0 0.0
    %994 = vmatprep.subr.mxu0 0.0
    %995 = vmatpush1.msra.mxu0 0.0
    %996 = vmatprep.subr.mxu0 0.0
    %997 = vmatpush1.msra.mxu0 0.0
    %998 = vmatprep.subr.mxu0 0.0
    %999 = vmatpush1.msra.mxu0 0.0
    %1000 = vmatprep.subr.mxu0 0.0
    %1001 = vmatpush1.msra.mxu0 0.0
    %1002 = vmatprep.subr.mxu0 0.0
    %1003 = vmatpush1.msra.mxu0 0.0
    %1004 = vmatprep.subr.mxu0 0.0
    %1005 = vmatpush1.msra.mxu0 0.0
    %1006 = vmatprep.subr.mxu0 0.0
    %1007 = vmatpush1.msra.mxu0 0.0
    %1008 = vmatprep.subr.mxu0 0.0
    %1009 = vmatpush1.msra.mxu0 0.0
    %1010 = vmatprep.subr.mxu0 0.0
    %1011 = vmatpush1.msra.mxu0 0.0
    %1012 = vmatprep.subr.mxu0 0.0
    %1013 = vmatpush1.msra.mxu0 0.0
    %1014 = vmatprep.subr.mxu0 0.0
    %1015 = vmatpush1.msra.mxu0 0.0
    %1016 = vmatprep.subr.mxu0 0.0
    %1017 = vmatpush1.msra.mxu0 0.0
    %1018 = vmatprep.subr.mxu0 0.0
    %1019 = vmatpush1.msra.mxu0 0.0
    %1020 = vmatprep.subr.mxu0 0.0
    %1021 = vmatpush1.msra.mxu0 0.0
    %1022 = vmatprep.subr.mxu0 0.0
    %1023 = vmatpush1.msra.mxu0 0.0
    %1024 = vmatprep.subr.mxu0 0.0
    %1025 = vmatpush1.msra.mxu0 0.0
    %1026 = vmatprep.subr.mxu0 0.0
    %1027 = vmatpush1.msra.mxu0 0.0
    %1028 = vmatprep.subr.mxu0 0.0
    %1029 = vmatpush1.msra.mxu0 0.0
    %1030 = vmatprep.subr.mxu0 0.0
    %1031 = vmatpush1.msra.mxu0 0.0
    %1032 = vmatprep.subr.mxu0 0.0
    %1033 = vmatpush1.msra.mxu0 0.0
    %1034 = vmatprep.subr.mxu0 0.0
    %1035 = vmatpush1.msra.mxu0 0.0
    %1036 = vmatprep.subr.mxu0 0.0
    %1037 = vmatpush1.msra.mxu0 0.0
    %1038 = vmatprep.mubr.f32.mxu0 0.0
    %1039 = vmatmul.mubr.f32.gmra.mrb[0].mxu0 %v969
    %v1040 = vpop.f32.mrb[0].mxu0
    %v1041 = vadd.f32 0.0, %v1040
    %v1042 = vpop.f32.mrb[0].mxu0
    %1043 = vmatprep.mubr.f32.mxu0 0.0
    %1044 = vmatmul.mubr.f32.gmra.mrb[0].mxu0 %v972
    %v1045 = vpop.f32.mrb[0].mxu0
    %v1046 = vadd.f32 0.0, %v1045
    %v1047 = vpop.f32.mrb[0].mxu0
    %1048 = vdwg.mxu0
    %v1049 = vmul.f32 %v1041, %v456
    %v1050 = vmul.f32 %v1046, %v461
    %v1051 = vld [vmem:[#allocation5 + $0x38b] sm:$0x1]
    %v1052 = vlaneseq
    %v1053 = vshrl.u32 %v1052, 7
    %v1054 = vsub.s32 0, %v1053
    %v1055 = vrot.slane %v1051, %v1054
    %1056 = vmatprep.subr.mxu0 0.0
    %1057 = vmatpush1.msra.mxu0 %v1049
    %1058 = vmatprep.subr.mxu0 0.0
    %1059 = vmatpush1.msra.mxu0 %v1050
    %1060 = vmatprep.subr.mxu0 0.0
    %1061 = vmatpush1.msra.mxu0 0.0
    %1062 = vmatprep.subr.mxu0 0.0
    %1063 = vmatpush1.msra.mxu0 0.0
    %1064 = vmatprep.subr.mxu0 0.0
    %1065 = vmatpush1.msra.mxu0 0.0
    %1066 = vmatprep.subr.mxu0 0.0
    %1067 = vmatpush1.msra.mxu0 0.0
    %1068 = vmatprep.subr.mxu0 0.0
    %1069 = vmatpush1.msra.mxu0 0.0
    %1070 = vmatprep.subr.mxu0 0.0
    %1071 = vmatpush1.msra.mxu0 0.0
    %1072 = vmatprep.subr.mxu0 0.0
    %1073 = vmatpush1.msra.mxu0 0.0
    %1074 = vmatprep.subr.mxu0 0.0
    %1075 = vmatpush1.msra.mxu0 0.0
    %1076 = vmatprep.subr.mxu0 0.0
    %1077 = vmatpush1.msra.mxu0 0.0
    %1078 = vmatprep.subr.mxu0 0.0
    %1079 = vmatpush1.msra.mxu0 0.0
    %1080 = vmatprep.subr.mxu0 0.0
    %1081 = vmatpush1.msra.mxu0 0.0
    %1082 = vmatprep.subr.mxu0 0.0
    %1083 = vmatpush1.msra.mxu0 0.0
    %1084 = vmatprep.subr.mxu0 0.0
    %1085 = vmatpush1.msra.mxu0 0.0
    %1086 = vmatprep.subr.mxu0 0.0
    %1087 = vmatpush1.msra.mxu0 0.0
    %1088 = vmatprep.subr.mxu0 0.0
    %1089 = vmatpush1.msra.mxu0 0.0
    %1090 = vmatprep.subr.mxu0 0.0
    %1091 = vmatpush1.msra.mxu0 0.0
    %1092 = vmatprep.subr.mxu0 0.0
    %1093 = vmatpush1.msra.mxu0 0.0
    %1094 = vmatprep.subr.mxu0 0.0
    %1095 = vmatpush1.msra.mxu0 0.0
    %1096 = vmatprep.subr.mxu0 0.0
    %1097 = vmatpush1.msra.mxu0 0.0
    %1098 = vmatprep.subr.mxu0 0.0
    %1099 = vmatpush1.msra.mxu0 0.0
    %1100 = vmatprep.subr.mxu0 0.0
    %1101 = vmatpush1.msra.mxu0 0.0
    %1102 = vmatprep.subr.mxu0 0.0
    %1103 = vmatpush1.msra.mxu0 0.0
    %1104 = vmatprep.subr.mxu0 0.0
    %1105 = vmatpush1.msra.mxu0 0.0
    %1106 = vmatprep.subr.mxu0 0.0
    %1107 = vmatpush1.msra.mxu0 0.0
    %1108 = vmatprep.subr.mxu0 0.0
    %1109 = vmatpush1.msra.mxu0 0.0
    %1110 = vmatprep.subr.mxu0 0.0
    %1111 = vmatpush1.msra.mxu0 0.0
    %1112 = vmatprep.subr.mxu0 0.0
    %1113 = vmatpush1.msra.mxu0 0.0
    %1114 = vmatprep.subr.mxu0 0.0
    %1115 = vmatpush1.msra.mxu0 0.0
    %1116 = vmatprep.subr.mxu0 0.0
    %1117 = vmatpush1.msra.mxu0 0.0
    %1118 = vmatprep.subr.mxu0 0.0
    %1119 = vmatpush1.msra.mxu0 0.0
    %1120 = vmatprep.mubr.f32.mxu0 0.0
    %1121 = vmatmul.mubr.f32.gmra.mrb[0].mxu0 %v814
    %v1122 = vpop.f32.mrb[0].mxu0
    %v1123 = vadd.f32 %v1055, %v1122
    %v1124 = vpop.f32.mrb[0].mxu0
    %1125 = vdwg.mxu0
    %v1127 = vsel %vm85, %v65, 0
    %1129 = vmatprep.subr.mxu0 0.0
    %1130 = vmatpush1.msra.mxu0 %v56
    %1131 = vmatprep.subr.mxu0 0.0
    %1132 = vmatpush1.msra.mxu0 0.0
    %1133 = vmatprep.subr.mxu0 0.0
    %1134 = vmatpush1.msra.mxu0 0.0
    %1135 = vmatprep.subr.mxu0 0.0
    %1136 = vmatpush1.msra.mxu0 0.0
    %1137 = vmatprep.subr.mxu0 0.0
    %1138 = vmatpush1.msra.mxu0 0.0
    %1139 = vmatprep.subr.mxu0 0.0
    %1140 = vmatpush1.msra.mxu0 0.0
    %1141 = vmatprep.subr.mxu0 0.0
    %1142 = vmatpush1.msra.mxu0 0.0
    %1143 = vmatprep.subr.mxu0 0.0
    %1144 = vmatpush1.msra.mxu0 0.0
    %1145 = vmatprep.subr.mxu0 0.0
    %1146 = vmatpush1.msra.mxu0 0.0
    %1147 = vmatprep.subr.mxu0 0.0
    %1148 = vmatpush1.msra.mxu0 0.0
    %1149 = vmatprep.subr.mxu0 0.0
    %1150 = vmatpush1.msra.mxu0 0.0
    %1151 = vmatprep.subr.mxu0 0.0
    %1152 = vmatpush1.msra.mxu0 0.0
    %1153 = vmatprep.subr.mxu0 0.0
    %1154 = vmatpush1.msra.mxu0 0.0
    %1155 = vmatprep.subr.mxu0 0.0
    %1156 = vmatpush1.msra.mxu0 0.0
    %1157 = vmatprep.subr.mxu0 0.0
    %1158 = vmatpush1.msra.mxu0 0.0
    %1159 = vmatprep.subr.mxu0 0.0
    %1160 = vmatpush1.msra.mxu0 0.0
    %1161 = vmatprep.subr.mxu0 0.0
    %1162 = vmatpush1.msra.mxu0 0.0
    %1163 = vmatprep.subr.mxu0 0.0
    %1164 = vmatpush1.msra.mxu0 0.0
    %1165 = vmatprep.subr.mxu0 0.0
    %1166 = vmatpush1.msra.mxu0 0.0
    %1167 = vmatprep.subr.mxu0 0.0
    %1168 = vmatpush1.msra.mxu0 0.0
    %1169 = vmatprep.subr.mxu0 0.0
    %1170 = vmatpush1.msra.mxu0 0.0
    %1171 = vmatprep.subr.mxu0 0.0
    %1172 = vmatpush1.msra.mxu0 0.0
    %1173 = vmatprep.subr.mxu0 0.0
    %1174 = vmatpush1.msra.mxu0 0.0
    %1175 = vmatprep.subr.mxu0 0.0
    %1176 = vmatpush1.msra.mxu0 0.0
    %1177 = vmatprep.subr.mxu0 0.0
    %1178 = vmatpush1.msra.mxu0 0.0
    %1179 = vmatprep.subr.mxu0 0.0
    %1180 = vmatpush1.msra.mxu0 0.0
    %1181 = vmatprep.subr.mxu0 0.0
    %1182 = vmatpush1.msra.mxu0 0.0
    %1183 = vmatprep.subr.mxu0 0.0
    %1184 = vmatpush1.msra.mxu0 0.0
    %1185 = vmatprep.subr.mxu0 0.0
    %1186 = vmatpush1.msra.mxu0 0.0
    %1187 = vmatprep.subr.mxu0 0.0
    %1188 = vmatpush1.msra.mxu0 0.0
    %1189 = vmatprep.subr.mxu0 0.0
    %1190 = vmatpush1.msra.mxu0 0.0
    %1191 = vmatprep.subr.mxu0 0.0
    %1192 = vmatpush1.msra.mxu0 0.0
    %1193 = vmatprep.mubr.f32.mxu0 0.0
    %1194 = vmatmul.mubr.f32.gmra.mrb[0].mxu0 %v1127
    %v1195 = vpop.f32.mrb[0].mxu0
    %v1196 = vadd.f32 0.0, %v1195
    %v1197 = vpop.f32.mrb[0].mxu0
    %1198 = vdwg.mxu0
    %v1199 = vld [vmem:[#allocation5 + $0x100] sm:$0xff]
    %v1200 = vld [vmem:[#allocation5 + $0x108] sm:$0xff]
    %v1201 = vld [vmem:[#allocation5 + $0x110] sm:$0xff]
    %v1202 = vld [vmem:[#allocation5 + $0x118] sm:$0xff]
    %v1203 = vld [vmem:[#allocation5 + $0x120] sm:$0xff]
    %v1204 = vld [vmem:[#allocation5 + $0x128] sm:$0xff]
    %v1205 = vld [vmem:[#allocation5 + $0x130] sm:$0xff]
    %v1206 = vld [vmem:[#allocation5 + $0x138] sm:$0xff]
    %v1207 = vld [vmem:[#allocation5 + $0x140] sm:$0xff]
    %v1208 = vld [vmem:[#allocation5 + $0x148] sm:$0xff]
    %v1209 = vld [vmem:[#allocation5 + $0x150] sm:$0xff]
    %v1210 = vld [vmem:[#allocation5 + $0x158] sm:$0xff]
    %v1211 = vld [vmem:[#allocation5 + $0x160] sm:$0xff]
    %v1212 = vld [vmem:[#allocation5 + $0x168] sm:$0xff]
    %v1213 = vld [vmem:[#allocation5 + $0x170] sm:$0xff]
    %v1214 = vld [vmem:[#allocation5 + $0x178] sm:$0xff]
    %v1215 = vld [vmem:[#allocation5 + $0x180] sm:$0xff]
    %v1216 = vld [vmem:[#allocation5 + $0x188] sm:$0xff]
    %v1217 = vld [vmem:[#allocation5 + $0x190] sm:$0xff]
    %v1218 = vld [vmem:[#allocation5 + $0x198] sm:$0xff]
    %v1219 = vld [vmem:[#allocation5 + $0x1a0] sm:$0xff]
    %v1220 = vld [vmem:[#allocation5 + $0x1a8] sm:$0xff]
    %v1221 = vld [vmem:[#allocation5 + $0x1b0] sm:$0xff]
    %v1222 = vld [vmem:[#allocation5 + $0x1b8] sm:$0xff]
    %v1223 = vld [vmem:[#allocation5 + $0x1c0] sm:$0xff]
    %v1224 = vld [vmem:[#allocation5 + $0x1c8] sm:$0xff]
    %v1225 = vld [vmem:[#allocation5 + $0x1d0] sm:$0xff]
    %v1226 = vld [vmem:[#allocation5 + $0x1d8] sm:$0xff]
    %v1227 = vld [vmem:[#allocation5 + $0x1e0] sm:$0xff]
    %v1228 = vld [vmem:[#allocation5 + $0x1e8] sm:$0xff]
    %v1229 = vld [vmem:[#allocation5 + $0x1f0] sm:$0xff]
    %v1230 = vld [vmem:[#allocation5 + $0x1f8] sm:$0xff]
    %v1231 = vld [vmem:[#allocation5 + $0x38c] sm:$0x1]
    %v1232 = vlaneseq
    %v1233 = vshrl.u32 %v1232, 7
    %v1234 = vsub.s32 0, %v1233
    %v1235 = vrot.slane %v1231, %v1234
    %1236 = vmatprep.subr.mxu0 0.0
    %1237 = vmatpush1.msra.mxu0 %v1199
    %1238 = vmatprep.subr.mxu0 0.0
    %1239 = vmatpush1.msra.mxu0 %v1200
    %1240 = vmatprep.subr.mxu0 0.0
    %1241 = vmatpush1.msra.mxu0 %v1201
    %1242 = vmatprep.subr.mxu0 0.0
    %1243 = vmatpush1.msra.mxu0 %v1202
    %1244 = vmatprep.subr.mxu0 0.0
    %1245 = vmatpush1.msra.mxu0 %v1203
    %1246 = vmatprep.subr.mxu0 0.0
    %1247 = vmatpush1.msra.mxu0 %v1204
    %1248 = vmatprep.subr.mxu0 0.0
    %1249 = vmatpush1.msra.mxu0 %v1205
    %1250 = vmatprep.subr.mxu0 0.0
    %1251 = vmatpush1.msra.mxu0 %v1206
    %1252 = vmatprep.subr.mxu0 0.0
    %1253 = vmatpush1.msra.mxu0 %v1207
    %1254 = vmatprep.subr.mxu0 0.0
    %1255 = vmatpush1.msra.mxu0 %v1208
    %1256 = vmatprep.subr.mxu0 0.0
    %1257 = vmatpush1.msra.mxu0 %v1209
    %1258 = vmatprep.subr.mxu0 0.0
    %1259 = vmatpush1.msra.mxu0 %v1210
    %1260 = vmatprep.subr.mxu0 0.0
    %1261 = vmatpush1.msra.mxu0 %v1211
    %1262 = vmatprep.subr.mxu0 0.0
    %1263 = vmatpush1.msra.mxu0 %v1212
    %1264 = vmatprep.subr.mxu0 0.0
    %1265 = vmatpush1.msra.mxu0 %v1213
    %1266 = vmatprep.subr.mxu0 0.0
    %1267 = vmatpush1.msra.mxu0 %v1214
    %1268 = vmatprep.subr.mxu0 0.0
    %1269 = vmatpush1.msra.mxu0 %v1215
    %1270 = vmatprep.subr.mxu0 0.0
    %1271 = vmatpush1.msra.mxu0 %v1216
    %1272 = vmatprep.subr.mxu0 0.0
    %1273 = vmatpush1.msra.mxu0 %v1217
    %1274 = vmatprep.subr.mxu0 0.0
    %1275 = vmatpush1.msra.mxu0 %v1218
    %1276 = vmatprep.subr.mxu0 0.0
    %1277 = vmatpush1.msra.mxu0 %v1219
    %1278 = vmatprep.subr.mxu0 0.0
    %1279 = vmatpush1.msra.mxu0 %v1220
    %1280 = vmatprep.subr.mxu0 0.0
    %1281 = vmatpush1.msra.mxu0 %v1221
    %1282 = vmatprep.subr.mxu0 0.0
    %1283 = vmatpush1.msra.mxu0 %v1222
    %1284 = vmatprep.subr.mxu0 0.0
    %1285 = vmatpush1.msra.mxu0 %v1223
    %1286 = vmatprep.subr.mxu0 0.0
    %1287 = vmatpush1.msra.mxu0 %v1224
    %1288 = vmatprep.subr.mxu0 0.0
    %1289 = vmatpush1.msra.mxu0 %v1225
    %1290 = vmatprep.subr.mxu0 0.0
    %1291 = vmatpush1.msra.mxu0 %v1226
    %1292 = vmatprep.subr.mxu0 0.0
    %1293 = vmatpush1.msra.mxu0 %v1227
    %1294 = vmatprep.subr.mxu0 0.0
    %1295 = vmatpush1.msra.mxu0 %v1228
    %1296 = vmatprep.subr.mxu0 0.0
    %1297 = vmatpush1.msra.mxu0 %v1229
    %1298 = vmatprep.subr.mxu0 0.0
    %1299 = vmatpush1.msra.mxu0 %v1230
    %1300 = vmatprep.mubr.f32.mxu0 %v1196
    %1301 = vmatmul.mubr.f32.gmra.mrb[0].mxu0 %v1123
    %v1302 = vpop.f32.mrb[0].mxu0
    %v1303 = vadd.f32 %v1235, %v1302
    %v1304 = vpop.f32.mrb[0].mxu0
    %1305 = vdwg.mxu0
    %v1306 = vmax.f32 %v1303, 0.0
    %1307 = vst [vmem:[#allocation7] sm:$0xff] %v1306
    %v1309 = vsel %vm85, %v66, 0
    %1311 = vmatprep.subr.mxu0 0.0
    %1312 = vmatpush1.msra.mxu0 %v1306
    %1313 = vmatprep.subr.mxu0 0.0
    %1314 = vmatpush1.msra.mxu0 0.0
    %1315 = vmatprep.subr.mxu0 0.0
    %1316 = vmatpush1.msra.mxu0 0.0
    %1317 = vmatprep.subr.mxu0 0.0
    %1318 = vmatpush1.msra.mxu0 0.0
    %1319 = vmatprep.subr.mxu0 0.0
    %1320 = vmatpush1.msra.mxu0 0.0
    %1321 = vmatprep.subr.mxu0 0.0
    %1322 = vmatpush1.msra.mxu0 0.0
    %1323 = vmatprep.subr.mxu0 0.0
    %1324 = vmatpush1.msra.mxu0 0.0
    %1325 = vmatprep.subr.mxu0 0.0
    %1326 = vmatpush1.msra.mxu0 0.0
    %1327 = vmatprep.subr.mxu0 0.0
    %1328 = vmatpush1.msra.mxu0 0.0
    %1329 = vmatprep.subr.mxu0 0.0
    %1330 = vmatpush1.msra.mxu0 0.0
    %1331 = vmatprep.subr.mxu0 0.0
    %1332 = vmatpush1.msra.mxu0 0.0
    %1333 = vmatprep.subr.mxu0 0.0
    %1334 = vmatpush1.msra.mxu0 0.0
    %1335 = vmatprep.subr.mxu0 0.0
    %1336 = vmatpush1.msra.mxu0 0.0
    %1337 = vmatprep.subr.mxu0 0.0
    %1338 = vmatpush1.msra.mxu0 0.0
    %1339 = vmatprep.subr.mxu0 0.0
    %1340 = vmatpush1.msra.mxu0 0.0
    %1341 = vmatprep.subr.mxu0 0.0
    %1342 = vmatpush1.msra.mxu0 0.0
    %1343 = vmatprep.subr.mxu0 0.0
    %1344 = vmatpush1.msra.mxu0 0.0
    %1345 = vmatprep.subr.mxu0 0.0
    %1346 = vmatpush1.msra.mxu0 0.0
    %1347 = vmatprep.subr.mxu0 0.0
    %1348 = vmatpush1.msra.mxu0 0.0
    %1349 = vmatprep.subr.mxu0 0.0
    %1350 = vmatpush1.msra.mxu0 0.0
    %1351 = vmatprep.subr.mxu0 0.0
    %1352 = vmatpush1.msra.mxu0 0.0
    %1353 = vmatprep.subr.mxu0 0.0
    %1354 = vmatpush1.msra.mxu0 0.0
    %1355 = vmatprep.subr.mxu0 0.0
    %1356 = vmatpush1.msra.mxu0 0.0
    %1357 = vmatprep.subr.mxu0 0.0
    %1358 = vmatpush1.msra.mxu0 0.0
    %1359 = vmatprep.subr.mxu0 0.0
    %1360 = vmatpush1.msra.mxu0 0.0
    %1361 = vmatprep.subr.mxu0 0.0
    %1362 = vmatpush1.msra.mxu0 0.0
    %1363 = vmatprep.subr.mxu0 0.0
    %1364 = vmatpush1.msra.mxu0 0.0
    %1365 = vmatprep.subr.mxu0 0.0
    %1366 = vmatpush1.msra.mxu0 0.0
    %1367 = vmatprep.subr.mxu0 0.0
    %1368 = vmatpush1.msra.mxu0 0.0
    %1369 = vmatprep.subr.mxu0 0.0
    %1370 = vmatpush1.msra.mxu0 0.0
    %1371 = vmatprep.subr.mxu0 0.0
    %1372 = vmatpush1.msra.mxu0 0.0
    %1373 = vmatprep.subr.mxu0 0.0
    %1374 = vmatpush1.msra.mxu0 0.0
    %1375 = vmatprep.mubr.f32.mxu0 0.0
    %1376 = vmatmul.mubr.f32.gmra.mrb[0].mxu0 %v1309
    %v1377 = vpop.f32.mrb[0].mxu0
    %v1378 = vadd.f32 0.0, %v1377
    %v1379 = vpop.f32.mrb[0].mxu0
    %1380 = vdwg.mxu0
    %v1381 = vld [vmem:[#allocation5 + $0x200] sm:$0xff]
    %v1382 = vld [vmem:[#allocation5 + $0x208] sm:$0xff]
    %v1383 = vld [vmem:[#allocation5 + $0x210] sm:$0xff]
    %v1384 = vld [vmem:[#allocation5 + $0x218] sm:$0xff]
    %v1385 = vld [vmem:[#allocation5 + $0x220] sm:$0xff]
    %v1386 = vld [vmem:[#allocation5 + $0x228] sm:$0xff]
    %v1387 = vld [vmem:[#allocation5 + $0x230] sm:$0xff]
    %v1388 = vld [vmem:[#allocation5 + $0x238] sm:$0xff]
    %v1389 = vld [vmem:[#allocation5 + $0x240] sm:$0xff]
    %v1390 = vld [vmem:[#allocation5 + $0x248] sm:$0xff]
    %v1391 = vld [vmem:[#allocation5 + $0x250] sm:$0xff]
    %v1392 = vld [vmem:[#allocation5 + $0x258] sm:$0xff]
    %v1393 = vld [vmem:[#allocation5 + $0x260] sm:$0xff]
    %v1394 = vld [vmem:[#allocation5 + $0x268] sm:$0xff]
    %v1395 = vld [vmem:[#allocation5 + $0x270] sm:$0xff]
    %v1396 = vld [vmem:[#allocation5 + $0x278] sm:$0xff]
    %v1397 = vld [vmem:[#allocation5 + $0x280] sm:$0xff]
    %v1398 = vld [vmem:[#allocation5 + $0x288] sm:$0xff]
    %v1399 = vld [vmem:[#allocation5 + $0x290] sm:$0xff]
    %v1400 = vld [vmem:[#allocation5 + $0x298] sm:$0xff]
    %v1401 = vld [vmem:[#allocation5 + $0x2a0] sm:$0xff]
    %v1402 = vld [vmem:[#allocation5 + $0x2a8] sm:$0xff]
    %v1403 = vld [vmem:[#allocation5 + $0x2b0] sm:$0xff]
    %v1404 = vld [vmem:[#allocation5 + $0x2b8] sm:$0xff]
    %v1405 = vld [vmem:[#allocation5 + $0x2c0] sm:$0xff]
    %v1406 = vld [vmem:[#allocation5 + $0x2c8] sm:$0xff]
    %v1407 = vld [vmem:[#allocation5 + $0x2d0] sm:$0xff]
    %v1408 = vld [vmem:[#allocation5 + $0x2d8] sm:$0xff]
    %v1409 = vld [vmem:[#allocation5 + $0x2e0] sm:$0xff]
    %v1410 = vld [vmem:[#allocation5 + $0x2e8] sm:$0xff]
    %v1411 = vld [vmem:[#allocation5 + $0x2f0] sm:$0xff]
    %v1412 = vld [vmem:[#allocation5 + $0x2f8] sm:$0xff]
    %v1413 = vld [vmem:[#allocation5 + $0x38d] sm:$0x1]
    %v1414 = vlaneseq
    %v1415 = vshrl.u32 %v1414, 7
    %v1416 = vsub.s32 0, %v1415
    %v1417 = vrot.slane %v1413, %v1416
    %1418 = vmatprep.subr.mxu0 0.0
    %1419 = vmatpush1.msra.mxu0 %v1381
    %1420 = vmatprep.subr.mxu0 0.0
    %1421 = vmatpush1.msra.mxu0 %v1382
    %1422 = vmatprep.subr.mxu0 0.0
    %1423 = vmatpush1.msra.mxu0 %v1383
    %1424 = vmatprep.subr.mxu0 0.0
    %1425 = vmatpush1.msra.mxu0 %v1384
    %1426 = vmatprep.subr.mxu0 0.0
    %1427 = vmatpush1.msra.mxu0 %v1385
    %1428 = vmatprep.subr.mxu0 0.0
    %1429 = vmatpush1.msra.mxu0 %v1386
    %1430 = vmatprep.subr.mxu0 0.0
    %1431 = vmatpush1.msra.mxu0 %v1387
    %1432 = vmatprep.subr.mxu0 0.0
    %1433 = vmatpush1.msra.mxu0 %v1388
    %1434 = vmatprep.subr.mxu0 0.0
    %1435 = vmatpush1.msra.mxu0 %v1389
    %1436 = vmatprep.subr.mxu0 0.0
    %1437 = vmatpush1.msra.mxu0 %v1390
    %1438 = vmatprep.subr.mxu0 0.0
    %1439 = vmatpush1.msra.mxu0 %v1391
    %1440 = vmatprep.subr.mxu0 0.0
    %1441 = vmatpush1.msra.mxu0 %v1392
    %1442 = vmatprep.subr.mxu0 0.0
    %1443 = vmatpush1.msra.mxu0 %v1393
    %1444 = vmatprep.subr.mxu0 0.0
    %1445 = vmatpush1.msra.mxu0 %v1394
    %1446 = vmatprep.subr.mxu0 0.0
    %1447 = vmatpush1.msra.mxu0 %v1395
    %1448 = vmatprep.subr.mxu0 0.0
    %1449 = vmatpush1.msra.mxu0 %v1396
    %1450 = vmatprep.subr.mxu0 0.0
    %1451 = vmatpush1.msra.mxu0 %v1397
    %1452 = vmatprep.subr.mxu0 0.0
    %1453 = vmatpush1.msra.mxu0 %v1398
    %1454 = vmatprep.subr.mxu0 0.0
    %1455 = vmatpush1.msra.mxu0 %v1399
    %1456 = vmatprep.subr.mxu0 0.0
    %1457 = vmatpush1.msra.mxu0 %v1400
    %1458 = vmatprep.subr.mxu0 0.0
    %1459 = vmatpush1.msra.mxu0 %v1401
    %1460 = vmatprep.subr.mxu0 0.0
    %1461 = vmatpush1.msra.mxu0 %v1402
    %1462 = vmatprep.subr.mxu0 0.0
    %1463 = vmatpush1.msra.mxu0 %v1403
    %1464 = vmatprep.subr.mxu0 0.0
    %1465 = vmatpush1.msra.mxu0 %v1404
    %1466 = vmatprep.subr.mxu0 0.0
    %1467 = vmatpush1.msra.mxu0 %v1405
    %1468 = vmatprep.subr.mxu0 0.0
    %1469 = vmatpush1.msra.mxu0 %v1406
    %1470 = vmatprep.subr.mxu0 0.0
    %1471 = vmatpush1.msra.mxu0 %v1407
    %1472 = vmatprep.subr.mxu0 0.0
    %1473 = vmatpush1.msra.mxu0 %v1408
    %1474 = vmatprep.subr.mxu0 0.0
    %1475 = vmatpush1.msra.mxu0 %v1409
    %1476 = vmatprep.subr.mxu0 0.0
    %1477 = vmatpush1.msra.mxu0 %v1410
    %1478 = vmatprep.subr.mxu0 0.0
    %1479 = vmatpush1.msra.mxu0 %v1411
    %1480 = vmatprep.subr.mxu0 0.0
    %1481 = vmatpush1.msra.mxu0 %v1412
    %1482 = vmatprep.mubr.f32.mxu0 %v1378
    %1483 = vmatmul.mubr.f32.gmra.mrb[0].mxu0 %v56
    %v1484 = vpop.f32.mrb[0].mxu0
    %v1485 = vadd.f32 %v1417, %v1484
    %v1486 = vpop.f32.mrb[0].mxu0
    %1487 = vdwg.mxu0
    %v1488 = vmax.f32 %v1485, 0.0
    %1489 = vst [vmem:[#allocation10] sm:$0xff] %v1488
    // Predicated region
    $region34: #{_lambda_.1} parent=1 // pred_check
      _
    $region35: #{_lambda_.1} parent=1 // pred_check_branch
      %1491 = sbr.rel (0) target = $region37
    $region36: #{_lambda_.1} parent=1 // pred_region
      %s1493 = ssub.s32 128, 128
      %1494 = vsyncadd [#allocation4], %s1493
      %s1496 = sshll.u32 [#allocation7], 4
      %s1497 = int_to_ptr.vmem [resolvable:$true] %s1496
      %1499 = dma.vmem_to_hbm [thread:$0]  %s1497, 128, %s6, [#allocation4]
    $region37: #{_lambda_.1} parent=1 // pred_fallthru
      _
    // Predicated region
    $region38: #{_lambda_.1} parent=1 // pred_check
      _
    $region39: #{_lambda_.1} parent=1 // pred_check_branch
      %1501 = sbr.rel (0) target = $region41
    $region40: #{_lambda_.1} parent=1 // pred_region
      %s1503 = ssub.s32 128, 128
      %1504 = vsyncadd [#allocation9], %s1503
      %s1506 = sshll.u32 [#allocation8], 4
      %s1507 = int_to_ptr.vmem [resolvable:$true] %s1506
      %1509 = dma.vmem_to_hbm [thread:$0]  %s1507, 128, %s7, [#allocation9]
    $region41: #{_lambda_.1} parent=1 // pred_fallthru
      _
    // Predicated region
    $region42: #{_lambda_.1} parent=1 // pred_check
      _
    $region43: #{_lambda_.1} parent=1 // pred_check_branch
      %1511 = sbr.rel (0) target = $region45
    $region44: #{_lambda_.1} parent=1 // pred_region
      %s1513 = ssub.s32 128, 128
      %1514 = vsyncadd [#allocation9], %s1513
      %s1516 = sshll.u32 [#allocation10], 4
      %s1517 = int_to_ptr.vmem [resolvable:$true] %s1516
      %1519 = dma.vmem_to_hbm [thread:$0]  %s1517, 128, %s8, [#allocation9]
    $region45: #{_lambda_.1} parent=1 // pred_fallthru
      _
    // Predicated region
    $region46: #{_lambda_.1} parent=1 // pred_check
      _
    $region47: #{_lambda_.1} parent=1 // pred_check_branch
      %1521 = sbr.rel (0) target = $region49
    $region48: #{_lambda_.1} parent=1 // pred_region
      %1522 = dma.done [#allocation4], 128
    $region49: #{_lambda_.1} parent=1 // pred_fallthru
      _
    // Predicated region
    $region50: #{_lambda_.1} parent=1 // pred_check
      _
    $region51: #{_lambda_.1} parent=1 // pred_check_branch
      %1524 = sbr.rel (0) target = $region53
    $region52: #{_lambda_.1} parent=1 // pred_region
      %1525 = dma.done [#allocation9], 128
    $region53: #{_lambda_.1} parent=1 // pred_fallthru
      _
    // Predicated region
    $region54: #{_lambda_.1} parent=1 // pred_check
      _
    $region55: #{_lambda_.1} parent=1 // pred_check_branch
      %1527 = sbr.rel (0) target = $region57
    $region56: #{_lambda_.1} parent=1 // pred_region
      %1528 = dma.done [#allocation9], 128
    $region57: #{_lambda_.1} parent=1 // pred_fallthru
      _
    %1529 = vsyncpa [#allocation3], 1
    %1530 = vsyncpa [#allocation6], 1
    %1531 = vsyncpa [#allocation4], 1
    %1532 = vsyncpa [#allocation9], 1

</llo_original>
